<compile_context>
chip_gen: v6e
topology: v6e:2x2x1
jax: 0.10.0
libtpu: 0.0.40
codegen_flags: <defaults>
</compile_context>

<pallas_src>
import functools
import math

import numpy as np
import jax
import jax.numpy as jnp
from jax.experimental import pallas as pl
from jax.experimental.pallas import tpu as pltpu


# ----------------------------- in-kernel helpers ----------------------------

def _mxu_dot(a, b):
    """bf16 MXU matmul with f32 accumulation (astype is a no-op if already bf16)."""
    return jnp.dot(a.astype(jnp.bfloat16), b.astype(jnp.bfloat16),
                   preferred_element_type=jnp.float32)


def _qk_dot(q, k):
    """q @ k.T without an explicit transpose (contract last dim of both)."""
    return jax.lax.dot_general(
        q.astype(jnp.bfloat16), k.astype(jnp.bfloat16),
        dimension_numbers=(((1,), (1,)), ((), ())),
        preferred_element_type=jnp.float32)


def _layernorm(x, g, b, eps):
    mean = jnp.mean(x, axis=-1, keepdims=True)
    var = jnp.mean(jnp.square(x - mean), axis=-1, keepdims=True)
    return (x - mean) * jax.lax.rsqrt(var + eps) * g + b


def _gelu(x):
    # TODO(synk): tanh-approx GELU; HF default 'gelu' is erf-based -> tiny numeric diff.
    c = 0.7978845608028654  # sqrt(2/pi)
    return 0.5 * x * (1.0 + jnp.tanh(c * (x + 0.044715 * x * x * x)))


# ------------------------------- fused kernel -------------------------------
# One grid step = one (batch element, transformer layer) pair.
#   l == 0      : initialize residual stream from the embedding LayerNorm.
#   every step  : one full transformer layer (weights streamed per layer).
#   l == L - 1  : pooler (CLS) + all regression heads in one lane-dense matmul.

def _bert_layer_kernel(emb_ref, mask_ref, eg_ref, eb_ref,
                       wqkv_ref, bqkv_ref, wo_ref, bo_ref, l1g_ref, l1b_ref,
                       w1_ref, b1_ref, w2_ref, b2_ref, l2g_ref, l2b_ref,
                       pw_ref, pb_ref, hw_ref, hb_ref,
                       heads_ref,
                       x_scratch,
                       *, num_heads, head_dim, eps):
    l = pl.program_id(1)
    H = x_scratch.shape[-1]
    scale = 1.0 / math.sqrt(head_dim)

    # ---- residual-stream init (embedding LayerNorm) on the first layer step ----
    @pl.when(l == 0)
    def _():
        x_scratch[...] = _layernorm(emb_ref[...].astype(jnp.float32),
                                    eg_ref[...], eb_ref[...], eps)

    x = x_scratch[...]
    mask = mask_ref[...]                                 # [1, S] additive padding mask

    # ---- fused QKV projection: [S, H] @ [H, 3H] ----
    qkv = _mxu_dot(x, wqkv_ref[...]) + bqkv_ref[...]     # [S, 3H] f32
    wo = wo_ref[...]                                     # [H, H] bf16

    # ---- multi-head attention (per-head 2D matmuls; output proj fused) ----
    # TODO(synk): per-head value slices are sub-128-lane at toy H; at real BERT dims
    # switch to a head-batched einsum path for fatter MXU pushes.
    attn = None
    for h in range(num_heads):
        q = qkv[:, h * head_dim:(h + 1) * head_dim]
        k = qkv[:, H + h * head_dim:H + (h + 1) * head_dim]
        v = qkv[:, 2 * H + h * head_dim:2 * H + (h + 1) * head_dim]
        s = _qk_dot(q, k) * scale + mask                 # [S, S]
        s = s - jnp.max(s, axis=-1, keepdims=True)
        p = jnp.exp(s)
        p = p * pl.reciprocal(jnp.sum(p, axis=-1, keepdims=True), approx=True)
        ctx_h = _mxu_dot(p, v)                           # [S, dh]
        # head-merge + output projection: ctx @ Wo == sum_h ctx_h @ Wo[h*dh:(h+1)*dh]
        part = _mxu_dot(ctx_h, wo[h * head_dim:(h + 1) * head_dim, :])
        attn = part if attn is None else attn + part

    x = _layernorm(attn + bo_ref[...] + x, l1g_ref[...], l1b_ref[...], eps)

    # ---- FFN ----
    hmid = _gelu(_mxu_dot(x, w1_ref[...]) + b1_ref[...])
    x = _layernorm(_mxu_dot(hmid, w2_ref[...]) + b2_ref[...] + x,
                   l2g_ref[...], l2b_ref[...], eps)
    x_scratch[...] = x

    # ---- pooler (CLS) + all regression heads, only after the last layer ----
    @pl.when(l == pl.num_programs(1) - 1)
    def _():
        cls = x[0:1, :]                                  # [1, H]
        pooled = jnp.tanh(_mxu_dot(cls, pw_ref[...]) + pb_ref[...])
        # dropout = identity in eval; all task heads in one lane-dense matmul
        heads_ref[...] = (_mxu_dot(pooled, hw_ref[...]) + hb_ref[...]
                          ).astype(heads_ref.dtype)


# ----------------------------- Parameter setup ------------------------------

class Cfg:
    vocab_size = 100
    max_pos = 16
    type_vocab = 2
    hidden = 32
    num_heads = 2
    head_dim = 16
    intermediate = 64
    num_layers = 2
    layer_norm_eps = 1e-12


_LANE = 128


def init_params(key, cfg, task_num_labels):
    keys = iter(jax.random.split(key, 128))
    H, I, L = cfg.hidden, cfg.intermediate, cfg.num_layers

    def nrm(shape):
        return jax.random.normal(next(keys), shape, dtype=jnp.float32) * 0.02

    p = {
        "word_emb": nrm((cfg.vocab_size, H)),
        "pos_emb": nrm((cfg.max_pos, H)),
        "type_emb": nrm((cfg.type_vocab, H)),
        "emb_ln_g": jnp.ones((1, H), jnp.float32),
        "emb_ln_b": jnp.zeros((1, H), jnp.float32),
        # MXU weights pre-cast to bf16 host-side (halves VMEM residency + DMA bytes)
        "pool_w": nrm((H, H)).astype(jnp.bfloat16),
        "pool_b": jnp.zeros((1, H), jnp.float32),
    }

    wqkv, bqkv, wo, bo = [], [], [], []
    l1g, l1b, w1, b1, w2, b2, l2g, l2b = [], [], [], [], [], [], [], []
    for _ in range(L):
        wq, wk, wv = nrm((H, H)), nrm((H, H)), nrm((H, H))
        wqkv.append(jnp.concatenate([wq, wk, wv], axis=1))      # [H, 3H]
        bqkv.append(jnp.zeros((1, 3 * H), jnp.float32))
        wo.append(nrm((H, H)));  bo.append(jnp.zeros((1, H), jnp.float32))
        l1g.append(jnp.ones((1, H), jnp.float32)); l1b.append(jnp.zeros((1, H), jnp.float32))
        w1.append(nrm((H, I)));  b1.append(jnp.zeros((1, I), jnp.float32))
        w2.append(nrm((I, H)));  b2.append(jnp.zeros((1, H), jnp.float32))
        l2g.append(jnp.ones((1, H), jnp.float32)); l2b.append(jnp.zeros((1, H), jnp.float32))

    p["layers"] = {
        "wqkv": jnp.stack(wqkv).astype(jnp.bfloat16),
        "bqkv": jnp.stack(bqkv),
        "wo": jnp.stack(wo).astype(jnp.bfloat16),
        "bo": jnp.stack(bo),
        "ln1_g": jnp.stack(l1g), "ln1_b": jnp.stack(l1b),
        "w1": jnp.stack(w1).astype(jnp.bfloat16), "b1": jnp.stack(b1),
        "w2": jnp.stack(w2).astype(jnp.bfloat16), "b2": jnp.stack(b2),
        "ln2_g": jnp.stack(l2g), "ln2_b": jnp.stack(l2b),
    }

    # concatenated heads (sorted by task id), zero-padded to a lane-dense 128 multiple
    hw, hb, slices, off = [], [], {}, 0
    for tid in sorted(task_num_labels):
        nl = task_num_labels[tid]
        hw.append(nrm((H, nl)))                  # nn.Linear weight ~ N(0, 0.02)
        hb.append(jnp.zeros((nl,), jnp.float32))
        slices[tid] = (off, nl)
        off += nl
    t_pad = max(_LANE, ((off + _LANE - 1) // _LANE) * _LANE)
    hw_cat = jnp.concatenate(hw, axis=1)                           # [H, total_labels]
    hb_cat = jnp.concatenate(hb).reshape(1, off)
    p["heads_w"] = jnp.pad(hw_cat, ((0, 0), (0, t_pad - off))).astype(jnp.bfloat16)
    p["heads_b"] = jnp.pad(hb_cat, ((0, 0), (0, t_pad - off)))
    p["head_slices"] = slices
    p["num_labels_total"] = off
    p["labels_padded"] = t_pad
    return p


# ------------------------------- Forward pass -------------------------------

def fused_encoder_heads(params, cfg, input_ids, attention_mask, token_type_ids):
    """Runs embeddings (JAX gathers) + fused (encoder + pooler + all heads) kernel.

    Returns heads_out of shape [B, labels_padded] (all task heads, lane-padded).
    """
    B, S = input_ids.shape
    H, I, L = cfg.hidden, cfg.intermediate, cfg.num_layers
    Tp = params["labels_padded"]

    # embedding gathers stay in plain JAX (glue); everything else is the fused kernel
    pos_ids = jnp.arange(S, dtype=jnp.int32)
    emb = (jnp.take(params["word_emb"], input_ids, axis=0)
           + jnp.take(params["pos_emb"], pos_ids, axis=0)[None, :, :]
           + jnp.take(params["type_emb"], token_type_ids, axis=0))
    add_mask = ((1.0 - attention_mask.astype(jnp.float32)) * -10000.0).reshape(B, 1, S)
    lp = params["layers"]

    kernel = functools.partial(
        _bert_layer_kernel, num_heads=cfg.num_heads,
        head_dim=cfg.head_dim, eps=cfg.layer_norm_eps)

    def const_spec(shape):
        zeros = (0,) * len(shape)
        return pl.BlockSpec(shape, lambda b, l: zeros)

    def per_layer(tail):
        idx = (0,) * len(tail)
        return pl.BlockSpec((None,) + tail, lambda b, l: (l,) + idx)

    def per_batch(tail):
        idx = (0,) * len(tail)
        return pl.BlockSpec((None,) + tail, lambda b, l: (b,) + idx)

    # advisory cost estimate for the XLA scheduler
    flops = (B * L * (8 * S * H * H + 4 * S * S * H + 4 * S * H * I)
             + B * (2 * H * H + 2 * H * Tp))
    transcendentals = B * L * (cfg.num_heads * S * S + S * I) + B * H
    bytes_accessed = int(sum(int(np.prod(v.shape)) * v.dtype.itemsize for v in [
        emb, add_mask, lp["wqkv"], lp["bqkv"], lp["wo"], lp["bo"],
        lp["w1"], lp["b1"], lp["w2"], lp["b2"],
        params["pool_w"], params["heads_w"]])) + B * Tp * 4

    heads_out = pl.pallas_call(
        kernel,
        out_shape=jax.ShapeDtypeStruct((B, 1, Tp), jnp.float32),
        grid=(B, L),
        in_specs=[per_batch((S, H)), per_batch((1, S)),        # emb, mask (resident per b)
                  const_spec((1, H)), const_spec((1, H)),      # emb LN
                  per_layer((H, 3 * H)), per_layer((1, 3 * H)),  # wqkv, bqkv (streamed)
                  per_layer((H, H)), per_layer((1, H)),        # wo, bo
                  per_layer((1, H)), per_layer((1, H)),        # ln1
                  per_layer((H, I)), per_layer((1, I)),        # w1, b1
                  per_layer((I, H)), per_layer((1, H)),        # w2, b2
                  per_layer((1, H)), per_layer((1, H)),        # ln2
                  const_spec((H, H)), const_spec((1, H)),      # pooler
                  const_spec((H, Tp)), const_spec((1, Tp))],   # all heads
        out_specs=pl.BlockSpec((None, 1, Tp), lambda b, l: (b, 0, 0)),
        scratch_shapes=[pltpu.VMEM((S, H), jnp.float32)],      # residual-stream carry
        compiler_params=pltpu.CompilerParams(
            dimension_semantics=("parallel", "arbitrary"),
            vmem_limit_bytes=32 * 1024 * 1024),
        cost_estimate=pl.CostEstimate(flops=flops,
                                      transcendentals=transcendentals,
                                      bytes_accessed=bytes_accessed),
    )(emb, add_mask,
      params["emb_ln_g"], params["emb_ln_b"],
      lp["wqkv"], lp["bqkv"], lp["wo"], lp["bo"], lp["ln1_g"], lp["ln1_b"],
      lp["w1"], lp["b1"], lp["w2"], lp["b2"], lp["ln2_g"], lp["ln2_b"],
      params["pool_w"], params["pool_b"], params["heads_w"], params["heads_b"])

    return heads_out.reshape(B, Tp)


def bert_multitask_forward(params, cfg, input_ids, attention_mask, token_type_ids,
                           task_ids_np):
    heads_out = fused_encoder_heads(params, cfg, input_ids, attention_mask,
                                    token_type_ids)

    # per-task routing done host-side (like torch.unique); all head matmuls already
    # computed in one lane-dense matmul inside the kernel -> just slice here.
    unique_task_ids = sorted(np.unique(task_ids_np).tolist())
    regr_output = None
    for tid in unique_task_ids:
        idx = np.nonzero(task_ids_np == tid)[0]
        off, nl = params["head_slices"][tid]
        rows = jnp.take(heads_out, jnp.asarray(idx, dtype=jnp.int32), axis=0)
        regr_output = rows[:, off:off + nl]
    # TODO(synk): labels / MSELoss training branch not implemented (labels=None path only).
    return (regr_output, ())


# ----------------------------------- main -----------------------------------

if __name__ == "__main__":
    cfg = Cfg()
    task_num_labels = {0: 1, 1: 2}   # two tasks with different num_labels

    key = jax.random.PRNGKey(0)
    kp, ki = jax.random.split(key)
    params = init_params(kp, cfg, task_num_labels)

    B, S = 4, 8
    input_ids = jax.random.randint(ki, (B, S), 0, cfg.vocab_size, dtype=jnp.int32)
    attention_mask = jnp.ones((B, S), dtype=jnp.int32)
    token_type_ids = jnp.zeros((B, S), dtype=jnp.int32)
    task_ids_np = np.array([0, 1, 0, 1], dtype=np.int32)

    regr_output, rest = bert_multitask_forward(
        params, cfg, input_ids, attention_mask, token_type_ids, task_ids_np)
    jax.block_until_ready(regr_output)

    assert regr_output.shape == (int((task_ids_np == 1).sum()), task_num_labels[1])
    assert bool(jnp.all(jnp.isfinite(regr_output)))
    print("KERNEL_OK")
</pallas_src>

<mosaic_0001>
module attributes {stable_mosaic.version = 11 : i64} {
  func.func @_bert_layer_kernel(%arg0: i32, %arg1: i32, %arg2: memref<1x8x32xf32, #tpu.memory_space<vmem>>, %arg3: memref<1x1x8xf32, #tpu.memory_space<vmem>>, %arg4: memref<1x32xf32, #tpu.memory_space<vmem>>, %arg5: memref<1x32xf32, #tpu.memory_space<vmem>>, %arg6: memref<1x32x96xbf16, #tpu.memory_space<vmem>>, %arg7: memref<1x1x96xf32, #tpu.memory_space<vmem>>, %arg8: memref<1x32x32xbf16, #tpu.memory_space<vmem>>, %arg9: memref<1x1x32xf32, #tpu.memory_space<vmem>>, %arg10: memref<1x1x32xf32, #tpu.memory_space<vmem>>, %arg11: memref<1x1x32xf32, #tpu.memory_space<vmem>>, %arg12: memref<1x32x64xbf16, #tpu.memory_space<vmem>>, %arg13: memref<1x1x64xf32, #tpu.memory_space<vmem>>, %arg14: memref<1x64x32xbf16, #tpu.memory_space<vmem>>, %arg15: memref<1x1x32xf32, #tpu.memory_space<vmem>>, %arg16: memref<1x1x32xf32, #tpu.memory_space<vmem>>, %arg17: memref<1x1x32xf32, #tpu.memory_space<vmem>>, %arg18: memref<32x32xbf16, #tpu.memory_space<vmem>>, %arg19: memref<1x32xf32, #tpu.memory_space<vmem>>, %arg20: memref<32x128xbf16, #tpu.memory_space<vmem>>, %arg21: memref<1x128xf32, #tpu.memory_space<vmem>>, %arg22: memref<1x1x128xf32, #tpu.memory_space<vmem>>, %arg23: memref<8x32xf32, #tpu.memory_space<vmem>>) attributes {dimension_semantics = [#tpu.dimension_semantics<parallel>, #tpu.dimension_semantics<arbitrary>], iteration_bounds = array<i64: 4, 2>, scalar_prefetch = 0 : i64, scratch_operands = 1 : i64, tpu.core_type = #tpu.core_type<tc>, window_params = [{transform_indices = @transform_0, window_bounds = array<i64: 1, 8, 32>}, {transform_indices = @transform_1, window_bounds = array<i64: 1, 1, 8>}, {pipeline_mode = #tpu.pipeline_mode<synchronous>, transform_indices = @transform_2, window_bounds = array<i64: 1, 32>}, {pipeline_mode = #tpu.pipeline_mode<synchronous>, transform_indices = @transform_3, window_bounds = array<i64: 1, 32>}, {transform_indices = @transform_4, window_bounds = array<i64: 1, 32, 96>}, {transform_indices = @transform_5, window_bounds = array<i64: 1, 1, 96>}, {transform_indices = @transform_6, window_bounds = array<i64: 1, 32, 32>}, {transform_indices = @transform_7, window_bounds = array<i64: 1, 1, 32>}, {transform_indices = @transform_8, window_bounds = array<i64: 1, 1, 32>}, {transform_indices = @transform_9, window_bounds = array<i64: 1, 1, 32>}, {transform_indices = @transform_10, window_bounds = array<i64: 1, 32, 64>}, {transform_indices = @transform_11, window_bounds = array<i64: 1, 1, 64>}, {transform_indices = @transform_12, window_bounds = array<i64: 1, 64, 32>}, {transform_indices = @transform_13, window_bounds = array<i64: 1, 1, 32>}, {transform_indices = @transform_14, window_bounds = array<i64: 1, 1, 32>}, {transform_indices = @transform_15, window_bounds = array<i64: 1, 1, 32>}, {pipeline_mode = #tpu.pipeline_mode<synchronous>, transform_indices = @transform_16, window_bounds = array<i64: 32, 32>}, {pipeline_mode = #tpu.pipeline_mode<synchronous>, transform_indices = @transform_17, window_bounds = array<i64: 1, 32>}, {pipeline_mode = #tpu.pipeline_mode<synchronous>, transform_indices = @transform_18, window_bounds = array<i64: 32, 128>}, {pipeline_mode = #tpu.pipeline_mode<synchronous>, transform_indices = @transform_19, window_bounds = array<i64: 1, 128>}, {transform_indices = @transform_20, window_bounds = array<i64: 1, 1, 128>}]} {
    %c0_i32 = arith.constant 0 : i32
    %0 = arith.cmpi eq, %arg1, %c0_i32 : i32
    %1 = arith.extui %0 : i1 to i32
    %c0_i32_0 = arith.constant 0 : i32
    %2 = arith.cmpi ne, %1, %c0_i32_0 : i32
    scf.if %2 {
      %c0_72 = arith.constant 0 : index
      %c0_73 = arith.constant 0 : index
      %c0_74 = arith.constant 0 : index
      %160 = vector.load %arg2[%c0_72, %c0_73, %c0_74] : memref<1x8x32xf32, #tpu.memory_space<vmem>>, vector<1x8x32xf32>
      %161 = vector.shape_cast %160 : vector<1x8x32xf32> to vector<8x32xf32>
      %c0_75 = arith.constant 0 : index
      %c0_76 = arith.constant 0 : index
      %162 = vector.load %arg4[%c0_75, %c0_76] : memref<1x32xf32, #tpu.memory_space<vmem>>, vector<1x32xf32>
      %c0_77 = arith.constant 0 : index
      %c0_78 = arith.constant 0 : index
      %163 = vector.load %arg5[%c0_77, %c0_78] : memref<1x32xf32, #tpu.memory_space<vmem>>, vector<1x32xf32>
      %cst_79 = arith.constant dense<0.000000e+00> : vector<8xf32>
      %164 = vector.multi_reduction <add>, %161, %cst_79 [1] : vector<8x32xf32> to vector<8xf32>
      %165 = vector.shape_cast %164 : vector<8xf32> to vector<8x1xf32>
      %cst_80 = arith.constant 3.200000e+01 : f32
      %166 = vector.broadcast %cst_80 : f32 to vector<8x1xf32>
      %167 = arith.divf %165, %166 : vector<8x1xf32>
      %168 = vector.broadcast %167 : vector<8x1xf32> to vector<8x32xf32>
      %169 = arith.subf %161, %168 : vector<8x32xf32>
      %170 = arith.mulf %169, %169 : vector<8x32xf32>
      %cst_81 = arith.constant dense<0.000000e+00> : vector<8xf32>
      %171 = vector.multi_reduction <add>, %170, %cst_81 [1] : vector<8x32xf32> to vector<8xf32>
      %172 = vector.shape_cast %171 : vector<8xf32> to vector<8x1xf32>
      %cst_82 = arith.constant 3.200000e+01 : f32
      %173 = vector.broadcast %cst_82 : f32 to vector<8x1xf32>
      %174 = arith.divf %172, %173 : vector<8x1xf32>
      %175 = vector.broadcast %167 : vector<8x1xf32> to vector<8x32xf32>
      %176 = arith.subf %161, %175 : vector<8x32xf32>
      %cst_83 = arith.constant 9.99999996E-13 : f32
      %177 = vector.broadcast %cst_83 : f32 to vector<8x1xf32>
      %178 = arith.addf %174, %177 : vector<8x1xf32>
      %179 = math.rsqrt %178 : vector<8x1xf32>
      %180 = vector.broadcast %179 : vector<8x1xf32> to vector<8x32xf32>
      %181 = arith.mulf %176, %180 : vector<8x32xf32>
      %182 = vector.broadcast %162 : vector<1x32xf32> to vector<8x32xf32>
      %183 = arith.mulf %181, %182 : vector<8x32xf32>
      %184 = vector.broadcast %163 : vector<1x32xf32> to vector<8x32xf32>
      %185 = arith.addf %183, %184 : vector<8x32xf32>
      %c0_84 = arith.constant 0 : index
      %c0_85 = arith.constant 0 : index
      %186 = vector.load %arg23[%c0_84, %c0_85] : memref<8x32xf32, #tpu.memory_space<vmem>>, vector<8x32xf32>
      tpu.vector_store %arg23[%c0_84, %c0_85], %185 {strides = array<i32>} : memref<8x32xf32, #tpu.memory_space<vmem>>, vector<8x32xf32>,
    } else {
    }
    %c0 = arith.constant 0 : index
    %c0_1 = arith.constant 0 : index
    %3 = vector.load %arg23[%c0, %c0_1] : memref<8x32xf32, #tpu.memory_space<vmem>>, vector<8x32xf32>
    %c0_2 = arith.constant 0 : index
    %c0_3 = arith.constant 0 : index
    %c0_4 = arith.constant 0 : index
    %4 = vector.load %arg3[%c0_2, %c0_3, %c0_4] : memref<1x1x8xf32, #tpu.memory_space<vmem>>, vector<1x1x8xf32>
    %5 = vector.shape_cast %4 : vector<1x1x8xf32> to vector<1x8xf32>
    %c0_5 = arith.constant 0 : index
    %c0_6 = arith.constant 0 : index
    %c0_7 = arith.constant 0 : index
    %6 = vector.load %arg6[%c0_5, %c0_6, %c0_7] : memref<1x32x96xbf16, #tpu.memory_space<vmem>>, vector<1x32x96xbf16>
    %7 = vector.shape_cast %6 : vector<1x32x96xbf16> to vector<32x96xbf16>
    %8 = arith.truncf %3 : vector<8x32xf32> to vector<8x32xbf16>
    %cst = arith.constant dense<0.000000e+00> : vector<8x96xf32>
    %9 = tpu.matmul %8, %7, %cst {dimension_numbers = #tpu.dot_dimension_numbers<[1], [0], [0], [1], [0, 0, 1, 1], [], []>} : vector<8x32xbf16>, vector<32x96xbf16>, vector<8x96xf32> -> vector<8x96xf32>
    %c0_8 = arith.constant 0 : index
    %c0_9 = arith.constant 0 : index
    %c0_10 = arith.constant 0 : index
    %10 = vector.load %arg7[%c0_8, %c0_9, %c0_10] : memref<1x1x96xf32, #tpu.memory_space<vmem>>, vector<1x1x96xf32>
    %11 = vector.shape_cast %10 : vector<1x1x96xf32> to vector<1x96xf32>
    %12 = vector.broadcast %11 : vector<1x96xf32> to vector<8x96xf32>
    %13 = arith.addf %9, %12 : vector<8x96xf32>
    %c0_11 = arith.constant 0 : index
    %c0_12 = arith.constant 0 : index
    %c0_13 = arith.constant 0 : index
    %14 = vector.load %arg8[%c0_11, %c0_12, %c0_13] : memref<1x32x32xbf16, #tpu.memory_space<vmem>>, vector<1x32x32xbf16>
    %15 = vector.shape_cast %14 : vector<1x32x32xbf16> to vector<32x32xbf16>
    %16 = vector.extract_strided_slice %13 {offsets = [0, 0], sizes = [8, 16], strides = [1, 1]} : vector<8x96xf32> to vector<8x16xf32>
    %17 = vector.extract_strided_slice %13 {offsets = [0, 32], sizes = [8, 16], strides = [1, 1]} : vector<8x96xf32> to vector<8x16xf32>
    %18 = vector.extract_strided_slice %13 {offsets = [0, 64], sizes = [8, 16], strides = [1, 1]} : vector<8x96xf32> to vector<8x16xf32>
    %19 = arith.truncf %16 : vector<8x16xf32> to vector<8x16xbf16>
    %20 = arith.truncf %17 : vector<8x16xf32> to vector<8x16xbf16>
    %cst_14 = arith.constant dense<0.000000e+00> : vector<8x8xf32>
    %21 = tpu.matmul %19, %20, %cst_14 {dimension_numbers = #tpu.dot_dimension_numbers<[1], [1], [0], [0], [0, 0, 1, 0], [], []>} : vector<8x16xbf16>, vector<8x16xbf16>, vector<8x8xf32> -> vector<8x8xf32>
    %cst_15 = arith.constant 2.500000e-01 : f32
    %22 = vector.broadcast %cst_15 : f32 to vector<8x8xf32>
    %23 = arith.mulf %21, %22 : vector<8x8xf32>
    %24 = vector.broadcast %5 : vector<1x8xf32> to vector<8x8xf32>
    %25 = arith.addf %23, %24 : vector<8x8xf32>
    %cst_16 = arith.constant dense<0xFF800000> : vector<8xf32>
    %26 = vector.multi_reduction <maximumf>, %25, %cst_16 [1] : vector<8x8xf32> to vector<8xf32>
    %27 = vector.shape_cast %26 : vector<8xf32> to vector<8x1xf32>
    %28 = vector.broadcast %27 : vector<8x1xf32> to vector<8x8xf32>
    %29 = arith.subf %25, %28 : vector<8x8xf32>
    %30 = math.exp %29 : vector<8x8xf32>
    %cst_17 = arith.constant dense<0.000000e+00> : vector<8xf32>
    %31 = vector.multi_reduction <add>, %30, %cst_17 [1] : vector<8x8xf32> to vector<8xf32>
    %32 = vector.shape_cast %31 : vector<8xf32> to vector<8x1xf32>
    %33 = tpu.reciprocal %32 {approx = true} : vector<8x1xf32> -> vector<8x1xf32>
    %34 = vector.broadcast %33 : vector<8x1xf32> to vector<8x8xf32>
    %35 = arith.mulf %30, %34 : vector<8x8xf32>
    %36 = arith.truncf %35 : vector<8x8xf32> to vector<8x8xbf16>
    %37 = arith.truncf %18 : vector<8x16xf32> to vector<8x16xbf16>
    %cst_18 = arith.constant dense<0.000000e+00> : vector<8x16xf32>
    %38 = tpu.matmul %36, %37, %cst_18 {dimension_numbers = #tpu.dot_dimension_numbers<[1], [0], [0], [1], [0, 0, 1, 1], [], []>} : vector<8x8xbf16>, vector<8x16xbf16>, vector<8x16xf32> -> vector<8x16xf32>
    %39 = vector.extract_strided_slice %15 {offsets = [0, 0], sizes = [16, 32], strides = [1, 1]} : vector<32x32xbf16> to vector<16x32xbf16>
    %40 = arith.truncf %38 : vector<8x16xf32> to vector<8x16xbf16>
    %cst_19 = arith.constant dense<0.000000e+00> : vector<8x32xf32>
    %41 = tpu.matmul %40, %39, %cst_19 {dimension_numbers = #tpu.dot_dimension_numbers<[1], [0], [0], [1], [0, 0, 1, 1], [], []>} : vector<8x16xbf16>, vector<16x32xbf16>, vector<8x32xf32> -> vector<8x32xf32>
    %42 = vector.extract_strided_slice %13 {offsets = [0, 16], sizes = [8, 16], strides = [1, 1]} : vector<8x96xf32> to vector<8x16xf32>
    %43 = vector.extract_strided_slice %13 {offsets = [0, 48], sizes = [8, 16], strides = [1, 1]} : vector<8x96xf32> to vector<8x16xf32>
    %44 = vector.extract_strided_slice %13 {offsets = [0, 80], sizes = [8, 16], strides = [1, 1]} : vector<8x96xf32> to vector<8x16xf32>
    %45 = arith.truncf %42 : vector<8x16xf32> to vector<8x16xbf16>
    %46 = arith.truncf %43 : vector<8x16xf32> to vector<8x16xbf16>
    %cst_20 = arith.constant dense<0.000000e+00> : vector<8x8xf32>
    %47 = tpu.matmul %45, %46, %cst_20 {dimension_numbers = #tpu.dot_dimension_numbers<[1], [1], [0], [0], [0, 0, 1, 0], [], []>} : vector<8x16xbf16>, vector<8x16xbf16>, vector<8x8xf32> -> vector<8x8xf32>
    %cst_21 = arith.constant 2.500000e-01 : f32
    %48 = vector.broadcast %cst_21 : f32 to vector<8x8xf32>
    %49 = arith.mulf %47, %48 : vector<8x8xf32>
    %50 = vector.broadcast %5 : vector<1x8xf32> to vector<8x8xf32>
    %51 = arith.addf %49, %50 : vector<8x8xf32>
    %cst_22 = arith.constant dense<0xFF800000> : vector<8xf32>
    %52 = vector.multi_reduction <maximumf>, %51, %cst_22 [1] : vector<8x8xf32> to vector<8xf32>
    %53 = vector.shape_cast %52 : vector<8xf32> to vector<8x1xf32>
    %54 = vector.broadcast %53 : vector<8x1xf32> to vector<8x8xf32>
    %55 = arith.subf %51, %54 : vector<8x8xf32>
    %56 = math.exp %55 : vector<8x8xf32>
    %cst_23 = arith.constant dense<0.000000e+00> : vector<8xf32>
    %57 = vector.multi_reduction <add>, %56, %cst_23 [1] : vector<8x8xf32> to vector<8xf32>
    %58 = vector.shape_cast %57 : vector<8xf32> to vector<8x1xf32>
    %59 = tpu.reciprocal %58 {approx = true} : vector<8x1xf32> -> vector<8x1xf32>
    %60 = vector.broadcast %59 : vector<8x1xf32> to vector<8x8xf32>
    %61 = arith.mulf %56, %60 : vector<8x8xf32>
    %62 = arith.truncf %61 : vector<8x8xf32> to vector<8x8xbf16>
    %63 = arith.truncf %44 : vector<8x16xf32> to vector<8x16xbf16>
    %cst_24 = arith.constant dense<0.000000e+00> : vector<8x16xf32>
    %64 = tpu.matmul %62, %63, %cst_24 {dimension_numbers = #tpu.dot_dimension_numbers<[1], [0], [0], [1], [0, 0, 1, 1], [], []>} : vector<8x8xbf16>, vector<8x16xbf16>, vector<8x16xf32> -> vector<8x16xf32>
    %65 = vector.extract_strided_slice %15 {offsets = [16, 0], sizes = [16, 32], strides = [1, 1]} : vector<32x32xbf16> to vector<16x32xbf16>
    %66 = arith.truncf %64 : vector<8x16xf32> to vector<8x16xbf16>
    %cst_25 = arith.constant dense<0.000000e+00> : vector<8x32xf32>
    %67 = tpu.matmul %66, %65, %cst_25 {dimension_numbers = #tpu.dot_dimension_numbers<[1], [0], [0], [1], [0, 0, 1, 1], [], []>} : vector<8x16xbf16>, vector<16x32xbf16>, vector<8x32xf32> -> vector<8x32xf32>
    %68 = arith.addf %41, %67 : vector<8x32xf32>
    %c0_26 = arith.constant 0 : index
    %c0_27 = arith.constant 0 : index
    %c0_28 = arith.constant 0 : index
    %69 = vector.load %arg9[%c0_26, %c0_27, %c0_28] : memref<1x1x32xf32, #tpu.memory_space<vmem>>, vector<1x1x32xf32>
    %70 = vector.shape_cast %69 : vector<1x1x32xf32> to vector<1x32xf32>
    %71 = vector.broadcast %70 : vector<1x32xf32> to vector<8x32xf32>
    %72 = arith.addf %68, %71 : vector<8x32xf32>
    %73 = arith.addf %72, %3 : vector<8x32xf32>
    %c0_29 = arith.constant 0 : index
    %c0_30 = arith.constant 0 : index
    %c0_31 = arith.constant 0 : index
    %74 = vector.load %arg10[%c0_29, %c0_30, %c0_31] : memref<1x1x32xf32, #tpu.memory_space<vmem>>, vector<1x1x32xf32>
    %75 = vector.shape_cast %74 : vector<1x1x32xf32> to vector<1x32xf32>
    %c0_32 = arith.constant 0 : index
    %c0_33 = arith.constant 0 : index
    %c0_34 = arith.constant 0 : index
    %76 = vector.load %arg11[%c0_32, %c0_33, %c0_34] : memref<1x1x32xf32, #tpu.memory_space<vmem>>, vector<1x1x32xf32>
    %77 = vector.shape_cast %76 : vector<1x1x32xf32> to vector<1x32xf32>
    %cst_35 = arith.constant dense<0.000000e+00> : vector<8xf32>
    %78 = vector.multi_reduction <add>, %73, %cst_35 [1] : vector<8x32xf32> to vector<8xf32>
    %79 = vector.shape_cast %78 : vector<8xf32> to vector<8x1xf32>
    %cst_36 = arith.constant 3.200000e+01 : f32
    %80 = vector.broadcast %cst_36 : f32 to vector<8x1xf32>
    %81 = arith.divf %79, %80 : vector<8x1xf32>
    %82 = vector.broadcast %81 : vector<8x1xf32> to vector<8x32xf32>
    %83 = arith.subf %73, %82 : vector<8x32xf32>
    %84 = arith.mulf %83, %83 : vector<8x32xf32>
    %cst_37 = arith.constant dense<0.000000e+00> : vector<8xf32>
    %85 = vector.multi_reduction <add>, %84, %cst_37 [1] : vector<8x32xf32> to vector<8xf32>
    %86 = vector.shape_cast %85 : vector<8xf32> to vector<8x1xf32>
    %cst_38 = arith.constant 3.200000e+01 : f32
    %87 = vector.broadcast %cst_38 : f32 to vector<8x1xf32>
    %88 = arith.divf %86, %87 : vector<8x1xf32>
    %89 = vector.broadcast %81 : vector<8x1xf32> to vector<8x32xf32>
    %90 = arith.subf %73, %89 : vector<8x32xf32>
    %cst_39 = arith.constant 9.99999996E-13 : f32
    %91 = vector.broadcast %cst_39 : f32 to vector<8x1xf32>
    %92 = arith.addf %88, %91 : vector<8x1xf32>
    %93 = math.rsqrt %92 : vector<8x1xf32>
    %94 = vector.broadcast %93 : vector<8x1xf32> to vector<8x32xf32>
    %95 = arith.mulf %90, %94 : vector<8x32xf32>
    %96 = vector.broadcast %75 : vector<1x32xf32> to vector<8x32xf32>
    %97 = arith.mulf %95, %96 : vector<8x32xf32>
    %98 = vector.broadcast %77 : vector<1x32xf32> to vector<8x32xf32>
    %99 = arith.addf %97, %98 : vector<8x32xf32>
    %c0_40 = arith.constant 0 : index
    %c0_41 = arith.constant 0 : index
    %c0_42 = arith.constant 0 : index
    %100 = vector.load %arg12[%c0_40, %c0_41, %c0_42] : memref<1x32x64xbf16, #tpu.memory_space<vmem>>, vector<1x32x64xbf16>
    %101 = vector.shape_cast %100 : vector<1x32x64xbf16> to vector<32x64xbf16>
    %102 = arith.truncf %99 : vector<8x32xf32> to vector<8x32xbf16>
    %cst_43 = arith.constant dense<0.000000e+00> : vector<8x64xf32>
    %103 = tpu.matmul %102, %101, %cst_43 {dimension_numbers = #tpu.dot_dimension_numbers<[1], [0], [0], [1], [0, 0, 1, 1], [], []>} : vector<8x32xbf16>, vector<32x64xbf16>, vector<8x64xf32> -> vector<8x64xf32>
    %c0_44 = arith.constant 0 : index
    %c0_45 = arith.constant 0 : index
    %c0_46 = arith.constant 0 : index
    %104 = vector.load %arg13[%c0_44, %c0_45, %c0_46] : memref<1x1x64xf32, #tpu.memory_space<vmem>>, vector<1x1x64xf32>
    %105 = vector.shape_cast %104 : vector<1x1x64xf32> to vector<1x64xf32>
    %106 = vector.broadcast %105 : vector<1x64xf32> to vector<8x64xf32>
    %107 = arith.addf %103, %106 : vector<8x64xf32>
    %cst_47 = arith.constant 5.000000e-01 : f32
    %108 = vector.broadcast %cst_47 : f32 to vector<8x64xf32>
    %109 = arith.mulf %108, %107 : vector<8x64xf32>
    %cst_48 = arith.constant 4.471500e-02 : f32
    %110 = vector.broadcast %cst_48 : f32 to vector<8x64xf32>
    %111 = arith.mulf %110, %107 : vector<8x64xf32>
    %112 = arith.mulf %111, %107 : vector<8x64xf32>
    %113 = arith.mulf %112, %107 : vector<8x64xf32>
    %114 = arith.addf %107, %113 : vector<8x64xf32>
    %cst_49 = arith.constant 0.797884583 : f32
    %115 = vector.broadcast %cst_49 : f32 to vector<8x64xf32>
    %116 = arith.mulf %115, %114 : vector<8x64xf32>
    %117 = math.tanh %116 : vector<8x64xf32>
    %cst_50 = arith.constant 1.000000e+00 : f32
    %118 = vector.broadcast %cst_50 : f32 to vector<8x64xf32>
    %119 = arith.addf %118, %117 : vector<8x64xf32>
    %120 = arith.mulf %109, %119 : vector<8x64xf32>
    %c0_51 = arith.constant 0 : index
    %c0_52 = arith.constant 0 : index
    %c0_53 = arith.constant 0 : index
    %121 = vector.load %arg14[%c0_51, %c0_52, %c0_53] : memref<1x64x32xbf16, #tpu.memory_space<vmem>>, vector<1x64x32xbf16>
    %122 = vector.shape_cast %121 : vector<1x64x32xbf16> to vector<64x32xbf16>
    %123 = arith.truncf %120 : vector<8x64xf32> to vector<8x64xbf16>
    %cst_54 = arith.constant dense<0.000000e+00> : vector<8x32xf32>
    %124 = tpu.matmul %123, %122, %cst_54 {dimension_numbers = #tpu.dot_dimension_numbers<[1], [0], [0], [1], [0, 0, 1, 1], [], []>} : vector<8x64xbf16>, vector<64x32xbf16>, vector<8x32xf32> -> vector<8x32xf32>
    %c0_55 = arith.constant 0 : index
    %c0_56 = arith.constant 0 : index
    %c0_57 = arith.constant 0 : index
    %125 = vector.load %arg15[%c0_55, %c0_56, %c0_57] : memref<1x1x32xf32, #tpu.memory_space<vmem>>, vector<1x1x32xf32>
    %126 = vector.shape_cast %125 : vector<1x1x32xf32> to vector<1x32xf32>
    %127 = vector.broadcast %126 : vector<1x32xf32> to vector<8x32xf32>
    %128 = arith.addf %124, %127 : vector<8x32xf32>
    %129 = arith.addf %128, %99 : vector<8x32xf32>
    %c0_58 = arith.constant 0 : index
    %c0_59 = arith.constant 0 : index
    %c0_60 = arith.constant 0 : index
    %130 = vector.load %arg16[%c0_58, %c0_59, %c0_60] : memref<1x1x32xf32, #tpu.memory_space<vmem>>, vector<1x1x32xf32>
    %131 = vector.shape_cast %130 : vector<1x1x32xf32> to vector<1x32xf32>
    %c0_61 = arith.constant 0 : index
    %c0_62 = arith.constant 0 : index
    %c0_63 = arith.constant 0 : index
    %132 = vector.load %arg17[%c0_61, %c0_62, %c0_63] : memref<1x1x32xf32, #tpu.memory_space<vmem>>, vector<1x1x32xf32>
    %133 = vector.shape_cast %132 : vector<1x1x32xf32> to vector<1x32xf32>
    %cst_64 = arith.constant dense<0.000000e+00> : vector<8xf32>
    %134 = vector.multi_reduction <add>, %129, %cst_64 [1] : vector<8x32xf32> to vector<8xf32>
    %135 = vector.shape_cast %134 : vector<8xf32> to vector<8x1xf32>
    %cst_65 = arith.constant 3.200000e+01 : f32
    %136 = vector.broadcast %cst_65 : f32 to vector<8x1xf32>
    %137 = arith.divf %135, %136 : vector<8x1xf32>
    %138 = vector.broadcast %137 : vector<8x1xf32> to vector<8x32xf32>
    %139 = arith.subf %129, %138 : vector<8x32xf32>
    %140 = arith.mulf %139, %139 : vector<8x32xf32>
    %cst_66 = arith.constant dense<0.000000e+00> : vector<8xf32>
    %141 = vector.multi_reduction <add>, %140, %cst_66 [1] : vector<8x32xf32> to vector<8xf32>
    %142 = vector.shape_cast %141 : vector<8xf32> to vector<8x1xf32>
    %cst_67 = arith.constant 3.200000e+01 : f32
    %143 = vector.broadcast %cst_67 : f32 to vector<8x1xf32>
    %144 = arith.divf %142, %143 : vector<8x1xf32>
    %145 = vector.broadcast %137 : vector<8x1xf32> to vector<8x32xf32>
    %146 = arith.subf %129, %145 : vector<8x32xf32>
    %cst_68 = arith.constant 9.99999996E-13 : f32
    %147 = vector.broadcast %cst_68 : f32 to vector<8x1xf32>
    %148 = arith.addf %144, %147 : vector<8x1xf32>
    %149 = math.rsqrt %148 : vector<8x1xf32>
    %150 = vector.broadcast %149 : vector<8x1xf32> to vector<8x32xf32>
    %151 = arith.mulf %146, %150 : vector<8x32xf32>
    %152 = vector.broadcast %131 : vector<1x32xf32> to vector<8x32xf32>
    %153 = arith.mulf %151, %152 : vector<8x32xf32>
    %154 = vector.broadcast %133 : vector<1x32xf32> to vector<8x32xf32>
    %155 = arith.addf %153, %154 : vector<8x32xf32>
    %c0_69 = arith.constant 0 : index
    %c0_70 = arith.constant 0 : index
    %156 = vector.load %arg23[%c0_69, %c0_70] : memref<8x32xf32, #tpu.memory_space<vmem>>, vector<8x32xf32>
    tpu.vector_store %arg23[%c0_69, %c0_70], %155 {strides = array<i32>} : memref<8x32xf32, #tpu.memory_space<vmem>>, vector<8x32xf32>,
    %c1_i32 = arith.constant 1 : i32
    %157 = arith.cmpi eq, %arg1, %c1_i32 : i32
    %158 = arith.extui %157 : i1 to i32
    %c0_i32_71 = arith.constant 0 : i32
    %159 = arith.cmpi ne, %158, %c0_i32_71 : i32
    scf.if %159 {
      %160 = vector.extract_strided_slice %155 {offsets = [0, 0], sizes = [1, 32], strides = [1, 1]} : vector<8x32xf32> to vector<1x32xf32>
      %c0_72 = arith.constant 0 : index
      %c0_73 = arith.constant 0 : index
      %161 = vector.load %arg18[%c0_72, %c0_73] : memref<32x32xbf16, #tpu.memory_space<vmem>>, vector<32x32xbf16>
      %162 = arith.truncf %160 : vector<1x32xf32> to vector<1x32xbf16>
      %cst_74 = arith.constant dense<0.000000e+00> : vector<1x32xf32>
      %163 = tpu.matmul %162, %161, %cst_74 {dimension_numbers = #tpu.dot_dimension_numbers<[1], [0], [0], [1], [0, 0, 1, 1], [], []>} : vector<1x32xbf16>, vector<32x32xbf16>, vector<1x32xf32> -> vector<1x32xf32>
      %c0_75 = arith.constant 0 : index
      %c0_76 = arith.constant 0 : index
      %164 = vector.load %arg19[%c0_75, %c0_76] : memref<1x32xf32, #tpu.memory_space<vmem>>, vector<1x32xf32>
      %165 = arith.addf %163, %164 : vector<1x32xf32>
      %166 = math.tanh %165 : vector<1x32xf32>
      %c0_77 = arith.constant 0 : index
      %c0_78 = arith.constant 0 : index
      %167 = vector.load %arg20[%c0_77, %c0_78] : memref<32x128xbf16, #tpu.memory_space<vmem>>, vector<32x128xbf16>
      %168 = arith.truncf %166 : vector<1x32xf32> to vector<1x32xbf16>
      %cst_79 = arith.constant dense<0.000000e+00> : vector<1x128xf32>
      %169 = tpu.matmul %168, %167, %cst_79 {dimension_numbers = #tpu.dot_dimension_numbers<[1], [0], [0], [1], [0, 0, 1, 1], [], []>} : vector<1x32xbf16>, vector<32x128xbf16>, vector<1x128xf32> -> vector<1x128xf32>
      %c0_80 = arith.constant 0 : index
      %c0_81 = arith.constant 0 : index
      %170 = vector.load %arg21[%c0_80, %c0_81] : memref<1x128xf32, #tpu.memory_space<vmem>>, vector<1x128xf32>
      %171 = arith.addf %169, %170 : vector<1x128xf32>
      %c0_82 = arith.constant 0 : index
      %c0_83 = arith.constant 0 : index
      %c0_84 = arith.constant 0 : index
      %172 = vector.load %arg22[%c0_82, %c0_83, %c0_84] : memref<1x1x128xf32, #tpu.memory_space<vmem>>, vector<1x1x128xf32>
      %173 = vector.shape_cast %172 : vector<1x1x128xf32> to vector<1x128xf32>
      %174 = vector.shape_cast %171 : vector<1x128xf32> to vector<1x1x128xf32>
      tpu.vector_store %arg22[%c0_82, %c0_83, %c0_84], %174 {strides = array<i32>} : memref<1x1x128xf32, #tpu.memory_space<vmem>>, vector<1x1x128xf32>,
    } else {
    }
    return
  }
  func.func @transform_0(%arg0: i32, %arg1: i32) -> (i32, i32, i32) {
    %c0_i32 = arith.constant 0 : i32
    %c0_i32_0 = arith.constant 0 : i32
    %c0_i32_1 = arith.constant 0 : i32
    return %arg0, %c0_i32, %c0_i32_0 : i32, i32, i32
  }
  func.func @transform_1(%arg0: i32, %arg1: i32) -> (i32, i32, i32) {
    %c0_i32 = arith.constant 0 : i32
    %c0_i32_0 = arith.constant 0 : i32
    %c0_i32_1 = arith.constant 0 : i32
    return %arg0, %c0_i32, %c0_i32_0 : i32, i32, i32
  }
  func.func @transform_2(%arg0: i32, %arg1: i32) -> (i32, i32) {
    %c0_i32 = arith.constant 0 : i32
    %c0_i32_0 = arith.constant 0 : i32
    %c0_i32_1 = arith.constant 0 : i32
    return %c0_i32, %c0_i32_0 : i32, i32
  }
  func.func @transform_3(%arg0: i32, %arg1: i32) -> (i32, i32) {
    %c0_i32 = arith.constant 0 : i32
    %c0_i32_0 = arith.constant 0 : i32
    %c0_i32_1 = arith.constant 0 : i32
    return %c0_i32, %c0_i32_0 : i32, i32
  }
  func.func @transform_4(%arg0: i32, %arg1: i32) -> (i32, i32, i32) {
    %c0_i32 = arith.constant 0 : i32
    %c0_i32_0 = arith.constant 0 : i32
    %c0_i32_1 = arith.constant 0 : i32
    return %arg1, %c0_i32, %c0_i32_0 : i32, i32, i32
  }
  func.func @transform_5(%arg0: i32, %arg1: i32) -> (i32, i32, i32) {
    %c0_i32 = arith.constant 0 : i32
    %c0_i32_0 = arith.constant 0 : i32
    %c0_i32_1 = arith.constant 0 : i32
    return %arg1, %c0_i32, %c0_i32_0 : i32, i32, i32
  }
  func.func @transform_6(%arg0: i32, %arg1: i32) -> (i32, i32, i32) {
    %c0_i32 = arith.constant 0 : i32
    %c0_i32_0 = arith.constant 0 : i32
    %c0_i32_1 = arith.constant 0 : i32
    return %arg1, %c0_i32, %c0_i32_0 : i32, i32, i32
  }
  func.func @transform_7(%arg0: i32, %arg1: i32) -> (i32, i32, i32) {
    %c0_i32 = arith.constant 0 : i32
    %c0_i32_0 = arith.constant 0 : i32
    %c0_i32_1 = arith.constant 0 : i32
    return %arg1, %c0_i32, %c0_i32_0 : i32, i32, i32
  }
  func.func @transform_8(%arg0: i32, %arg1: i32) -> (i32, i32, i32) {
    %c0_i32 = arith.constant 0 : i32
    %c0_i32_0 = arith.constant 0 : i32
    %c0_i32_1 = arith.constant 0 : i32
    return %arg1, %c0_i32, %c0_i32_0 : i32, i32, i32
  }
  func.func @transform_9(%arg0: i32, %arg1: i32) -> (i32, i32, i32) {
    %c0_i32 = arith.constant 0 : i32
    %c0_i32_0 = arith.constant 0 : i32
    %c0_i32_1 = arith.constant 0 : i32
    return %arg1, %c0_i32, %c0_i32_0 : i32, i32, i32
  }
  func.func @transform_10(%arg0: i32, %arg1: i32) -> (i32, i32, i32) {
    %c0_i32 = arith.constant 0 : i32
    %c0_i32_0 = arith.constant 0 : i32
    %c0_i32_1 = arith.constant 0 : i32
    return %arg1, %c0_i32, %c0_i32_0 : i32, i32, i32
  }
  func.func @transform_11(%arg0: i32, %arg1: i32) -> (i32, i32, i32) {
    %c0_i32 = arith.constant 0 : i32
    %c0_i32_0 = arith.constant 0 : i32
    %c0_i32_1 = arith.constant 0 : i32
    return %arg1, %c0_i32, %c0_i32_0 : i32, i32, i32
  }
  func.func @transform_12(%arg0: i32, %arg1: i32) -> (i32, i32, i32) {
    %c0_i32 = arith.constant 0 : i32
    %c0_i32_0 = arith.constant 0 : i32
    %c0_i32_1 = arith.constant 0 : i32
    return %arg1, %c0_i32, %c0_i32_0 : i32, i32, i32
  }
  func.func @transform_13(%arg0: i32, %arg1: i32) -> (i32, i32, i32) {
    %c0_i32 = arith.constant 0 : i32
    %c0_i32_0 = arith.constant 0 : i32
    %c0_i32_1 = arith.constant 0 : i32
    return %arg1, %c0_i32, %c0_i32_0 : i32, i32, i32
  }
  func.func @transform_14(%arg0: i32, %arg1: i32) -> (i32, i32, i32) {
    %c0_i32 = arith.constant 0 : i32
    %c0_i32_0 = arith.constant 0 : i32
    %c0_i32_1 = arith.constant 0 : i32
    return %arg1, %c0_i32, %c0_i32_0 : i32, i32, i32
  }
  func.func @transform_15(%arg0: i32, %arg1: i32) -> (i32, i32, i32) {
    %c0_i32 = arith.constant 0 : i32
    %c0_i32_0 = arith.constant 0 : i32
    %c0_i32_1 = arith.constant 0 : i32
    return %arg1, %c0_i32, %c0_i32_0 : i32, i32, i32
  }
  func.func @transform_16(%arg0: i32, %arg1: i32) -> (i32, i32) {
    %c0_i32 = arith.constant 0 : i32
    %c0_i32_0 = arith.constant 0 : i32
    %c0_i32_1 = arith.constant 0 : i32
    return %c0_i32, %c0_i32_0 : i32, i32
  }
  func.func @transform_17(%arg0: i32, %arg1: i32) -> (i32, i32) {
    %c0_i32 = arith.constant 0 : i32
    %c0_i32_0 = arith.constant 0 : i32
    %c0_i32_1 = arith.constant 0 : i32
    return %c0_i32, %c0_i32_0 : i32, i32
  }
  func.func @transform_18(%arg0: i32, %arg1: i32) -> (i32, i32) {
    %c0_i32 = arith.constant 0 : i32
    %c0_i32_0 = arith.constant 0 : i32
    %c0_i32_1 = arith.constant 0 : i32
    return %c0_i32, %c0_i32_0 : i32, i32
  }
  func.func @transform_19(%arg0: i32, %arg1: i32) -> (i32, i32) {
    %c0_i32 = arith.constant 0 : i32
    %c0_i32_0 = arith.constant 0 : i32
    %c0_i32_1 = arith.constant 0 : i32
    return %c0_i32, %c0_i32_0 : i32, i32
  }
  func.func @transform_20(%arg0: i32, %arg1: i32) -> (i32, i32, i32) {
    %c0_i32 = arith.constant 0 : i32
    %c0_i32_0 = arith.constant 0 : i32
    %c0_i32_1 = arith.constant 0 : i32
    return %arg0, %c0_i32, %c0_i32_0 : i32, i32, i32
  }
}

</mosaic_0001>

<llo_original>
// kernel: tpu_custom_call.1
$region0: #{tpu_custom_call.1}
  #allocation0 [shape = 'u32[]', space=smem, size = 0x4, offset = 0x4, fixed_abs, tag = 'smem constant byte address 0x4 - core index']
  #allocation1 [shape = 'u32[144,128]{1,0:T(1,128)}', space=vmem, size = 0x12000, scoped, tag = 'internal scratch']
  #allocation2 [shape = 'f32[8,32]{1,0:T(8,128)}', space=vmem, size = 0x1000, scoped, tag = 'scratch operand']
  %s0 = inlined_call_operand.vmem [shape: f32[4,8,32], index: 0, kind: input, shape index: {}]
  %s1 = inlined_call_operand.hbm [shape: f32[4,1,8], index: 1, kind: input, shape index: {}]
  %s2 = inlined_call_operand.hbm [shape: f32[1,32], index: 2, kind: input, shape index: {}]
  %s3 = inlined_call_operand.hbm [shape: f32[1,32], index: 3, kind: input, shape index: {}]
  %s4 = inlined_call_operand.vmem [shape: bf16[2,32,96], index: 4, kind: input, shape index: {}]
  %s5 = inlined_call_operand.hbm [shape: f32[2,1,96], index: 5, kind: input, shape index: {}]
  %s6 = inlined_call_operand.vmem [shape: bf16[2,32,32], index: 6, kind: input, shape index: {}]
  %s7 = inlined_call_operand.hbm [shape: f32[2,1,32], index: 7, kind: input, shape index: {}]
  %s8 = inlined_call_operand.hbm [shape: f32[2,1,32], index: 8, kind: input, shape index: {}]
  %s9 = inlined_call_operand.hbm [shape: f32[2,1,32], index: 9, kind: input, shape index: {}]
  %s10 = inlined_call_operand.hbm [shape: bf16[2,32,64], index: 10, kind: input, shape index: {}]
  %s11 = inlined_call_operand.hbm [shape: f32[2,1,64], index: 11, kind: input, shape index: {}]
  %s12 = inlined_call_operand.vmem [shape: bf16[2,64,32], index: 12, kind: input, shape index: {}]
  %s13 = inlined_call_operand.hbm [shape: f32[2,1,32], index: 13, kind: input, shape index: {}]
  %s14 = inlined_call_operand.hbm [shape: f32[2,1,32], index: 14, kind: input, shape index: {}]
  %s15 = inlined_call_operand.hbm [shape: f32[2,1,32], index: 15, kind: input, shape index: {}]
  %s16 = inlined_call_operand.vmem [shape: bf16[32,32], index: 16, kind: input, shape index: {}]
  %s17 = inlined_call_operand.hbm [shape: f32[1,32], index: 17, kind: input, shape index: {}]
  %s18 = inlined_call_operand.vmem [shape: bf16[32,128], index: 18, kind: input, shape index: {}]
  %s19 = inlined_call_operand.vmem [shape: f32[1,128], index: 19, kind: input, shape index: {}]
  %s20 = inlined_call_operand.hbm [shape: f32[4,1,128], index: 20, kind: output, shape index: {}]
  %s21 = sld [smem:[#allocation0]]
  $region173: #{tpu_custom_call.1} parent=0
    _
  %s23 = ssub.s32 1, %s21
  %s24 = scalar_select 0, %s23, %s21
  $region1: #{tpu_custom_call.1} parent=0
    #allocation3 [shape = 'u8[1024]{0}', space=vmem, size = 0x400, scoped, tag = 'input window, operand 1']
    #allocation4 [shape = 's32[2]{0}', space=sflag, size = 0x8, scoped, tag = 'scoped memory for tpu_custom_call.1']
    #allocation5 [shape = 's32[2]{0}', space=sflag, size = 0x8, scoped, tag = 'scoped memory for tpu_custom_call.1']
    #allocation6 [shape = 'u8[512]{0}', space=vmem, size = 0x400, scoped, tag = 'input window, operand 2, single buffered']
    #allocation7 [shape = 's32[1]{0}', space=sflag, size = 0x4, scoped, tag = 'scoped memory for tpu_custom_call.1']
    #allocation8 [shape = 'u8[512]{0}', space=vmem, size = 0x400, scoped, tag = 'input window, operand 3, single buffered']
    #allocation9 [shape = 'u8[1024]{0}', space=vmem, size = 0x400, scoped, tag = 'input window, operand 5']
    #allocation10 [shape = 's32[2]{0}', space=sflag, size = 0x8, scoped, tag = 'scoped memory for tpu_custom_call.1']
    #allocation11 [shape = 'u8[1024]{0}', space=vmem, size = 0x400, scoped, tag = 'input window, operand 7']
    #allocation12 [shape = 'u8[1024]{0}', space=vmem, size = 0x400, scoped, tag = 'input window, operand 8']
    #allocation13 [shape = 's32[2]{0}', space=sflag, size = 0x8, scoped, tag = 'scoped memory for tpu_custom_call.1']
    #allocation14 [shape = 'u8[1024]{0}', space=vmem, size = 0x400, scoped, tag = 'input window, operand 9']
    #allocation15 [shape = 'u8[16384]{0}', space=vmem, size = 0x4000, scoped, tag = 'input window, operand 10']
    #allocation16 [shape = 's32[2]{0}', space=sflag, size = 0x8, scoped, tag = 'scoped memory for tpu_custom_call.1']
    #allocation17 [shape = 'u8[1024]{0}', space=vmem, size = 0x400, scoped, tag = 'input window, operand 11']
    #allocation18 [shape = 'u8[1024]{0}', space=vmem, size = 0x400, scoped, tag = 'input window, operand 13']
    #allocation19 [shape = 's32[2]{0}', space=sflag, size = 0x8, scoped, tag = 'scoped memory for tpu_custom_call.1']
    #allocation20 [shape = 'u8[1024]{0}', space=vmem, size = 0x400, scoped, tag = 'input window, operand 14']
    #allocation21 [shape = 'u8[1024]{0}', space=vmem, size = 0x400, scoped, tag = 'input window, operand 15']
    #allocation22 [shape = 's32[2]{0}', space=sflag, size = 0x8, scoped, tag = 'scoped memory for tpu_custom_call.1']
    #allocation23 [shape = 'u8[512]{0}', space=vmem, size = 0x400, scoped, tag = 'input window, operand 17, single buffered']
    #allocation24 [shape = 'u8[1024]{0}', space=vmem, size = 0x400, scoped, tag = 'output window, operand 0']
    %25 = vsyncpa [#allocation4], 0
    %s26 = scalar_lea.sflag [#allocation4], 1
    %27 = vsyncpa %s26, 0
    %28 = vsyncpa [#allocation7], 0
    %29 = vsyncpa [#allocation10], 0
    %s30 = scalar_lea.sflag [#allocation10], 1
    %31 = vsyncpa %s30, 0
    %32 = vsyncpa [#allocation13], 0
    %s33 = scalar_lea.sflag [#allocation13], 1
    %34 = vsyncpa %s33, 0
    %35 = vsyncpa [#allocation16], 0
    %s36 = scalar_lea.sflag [#allocation16], 1
    %37 = vsyncpa %s36, 0
    %38 = vsyncpa [#allocation19], 0
    %s39 = scalar_lea.sflag [#allocation19], 1
    %40 = vsyncpa %s39, 0
    %41 = vsyncpa [#allocation22], 0
    %s42 = scalar_lea.sflag [#allocation22], 1
    %43 = vsyncpa %s42, 0
    %44 = vsyncpa [#allocation5], 0
    %s45 = scalar_lea.sflag [#allocation5], 1
    %46 = vsyncpa %s45, 0
    loop: start=0, step=1, limit=10
    $region2: #{tpu_custom_call.1} parent=1 // loop_pre_header
      _
    $region3: #{tpu_custom_call.1} parent=1 // loop_header
      %s48 = sphi 0, %s52
      %p49 = scmp.ge.s32.totalorder %s48, 10
      %s55 = sphi 0, %s67
      %s56 = sphi 0, %s63
      %s57 = sphi 0, %s55
      %s58 = sphi 0, %s56
      %s59 = sphi 0, %s57
      %s60 = sphi 0, %s58
      %s70 = sphi 0, %s72
      %s73 = sphi 0, %s70
      %s74 = sphi 0, %s73
      %s90 = sphi 0, %s74
      %s96 = sphi 0, %s98
      %s99 = sphi 0, %s96
      %s100 = sphi 0, %s99
      %s116 = sphi 0, %s100
      %s120 = sphi 0, %s120
      %s122 = sphi 0, %s120
      %s123 = sphi 0, %s122
      %s137 = sphi 0, %s123
      %s141 = sphi 0, %s141
      %s143 = sphi 0, %s141
      %s144 = sphi 0, %s143
      %s158 = sphi 0, %s144
      %s164 = sphi 0, %s166
      %s167 = sphi 0, %s164
      %s168 = sphi 0, %s167
      %s184 = sphi 0, %s168
      %s190 = sphi 0, %s192
      %s193 = sphi 0, %s190
      %s194 = sphi 0, %s193
      %s210 = sphi 0, %s194
      %s216 = sphi 0, %s218
      %s219 = sphi 0, %s216
      %s220 = sphi 0, %s219
      %s236 = sphi 0, %s220
      %s242 = sphi 0, %s244
      %s245 = sphi 0, %s242
      %s246 = sphi 0, %s245
      %s262 = sphi 0, %s246
      %s268 = sphi 0, %s270
      %s271 = sphi 0, %s268
      %s272 = sphi 0, %s271
      %s288 = sphi 0, %s272
      %s294 = sphi 0, %s296
      %s297 = sphi 0, %s294
      %s298 = sphi 0, %s297
      %s314 = sphi 0, %s298
      %s320 = sphi 0, %s322
      %s323 = sphi 0, %s320
      %s324 = sphi 0, %s323
      %s340 = sphi 0, %s324
      %s346 = sphi 0, %s348
      %s349 = sphi 0, %s346
      %s350 = sphi 0, %s349
      %s366 = sphi 0, %s350
      %s372 = sphi 0, %s374
      %s375 = sphi 0, %s372
      %s376 = sphi 0, %s375
      %s392 = sphi 0, %s376
      %s398 = sphi 0, %s400
      %s401 = sphi 0, %s398
      %s402 = sphi 0, %s401
      %s418 = sphi 0, %s402
      %s424 = sphi 0, %s426
      %s427 = sphi 0, %s424
      %s428 = sphi 0, %s427
      %s444 = sphi 0, %s428
      %s450 = sphi 0, %s452
      %s453 = sphi 0, %s450
      %s454 = sphi 0, %s453
      %s470 = sphi 0, %s454
      %s474 = sphi 0, %s474
      %s476 = sphi 0, %s474
      %s477 = sphi 0, %s476
      %s491 = sphi 0, %s477
      %s495 = sphi 0, %s495
      %s497 = sphi 0, %s495
      %s498 = sphi 0, %s497
      %s512 = sphi 0, %s498
      %s516 = sphi 0, %s516
      %s518 = sphi 0, %s516
      %s519 = sphi 0, %s518
      %s533 = sphi 0, %s519
      %s537 = sphi 0, %s537
      %s539 = sphi 0, %s537
      %s540 = sphi 0, %s539
      %s554 = sphi 0, %s540
      %s560 = sphi 0, %s562
      %s563 = sphi 0, %s560
      %s564 = sphi 0, %s563
      %s580 = sphi 0, %s564
    $region4: #{tpu_custom_call.1} parent=1 // loop_header_branch
      %51 = sbr.rel (%p49) target = $region8
    $region5: #{tpu_custom_call.1} parent=1 // loop_body
      %s53 = ssub.s32 %s48, 1
      %s54 = ssub.s32 %s48, 2
      %s61 = sadd.s32 1, %s56
      %p62 = scmp.ge.s32.totalorder %s61, 2
      %s63 = scalar_select %p62, 0, %s61
      %s64 = sadd.s32 1, %s55
      %s65 = scalar_select %p62, %s64, %s55
      %p66 = scmp.ge.s32.totalorder %s65, 4
      %s67 = scalar_select %p66, 0, %s65
      %s68 = ssub.s32 %s55, %s67
      %p69 = scmp.eq.s32.totalorder %s68, 0
      %s71 = sadd.s32 %s70, 1
      %s72 = scalar_select %p69, %s70, %s71
      %p75 = pneg %p69
      %p76 = scmp.eq.s32.totalorder %s48, 7
      %p77 = por %p75, %p76
      %p78 = scmp.ne.s32.totalorder %s70, %s73
      %p79 = scmp.eq.s32.totalorder %s48, 0
      %p80 = por %p78, %p79
      %p81 = scmp.ne.s32.totalorder %s70, %s73
      %p82 = scmp.eq.s32.totalorder %s53, 7
      %p83 = por %p81, %p82
      %p84 = scmp.ne.s32.totalorder %s73, %s74
      %p85 = scmp.eq.s32.totalorder %s53, 0
      %p86 = por %p84, %p85
      %p87 = scmp.ne.s32.totalorder %s73, %s74
      %p88 = scmp.eq.s32.totalorder %s54, 7
      %p89 = por %p87, %p88
      %p91 = scmp.ne.s32.totalorder %s74, %s90
      %p92 = scmp.eq.s32.totalorder %s54, 0
      %p93 = por %p91, %p92
      %s94 = ssub.s32 %s55, %s67
      %p95 = scmp.eq.s32.totalorder %s94, 0
      %s97 = sadd.s32 %s96, 1
      %s98 = scalar_select %p95, %s96, %s97
      %p101 = pneg %p95
      %p102 = scmp.eq.s32.totalorder %s48, 7
      %p103 = por %p101, %p102
      %p104 = scmp.ne.s32.totalorder %s96, %s99
      %p105 = scmp.eq.s32.totalorder %s48, 0
      %p106 = por %p104, %p105
      %p107 = scmp.ne.s32.totalorder %s96, %s99
      %p108 = scmp.eq.s32.totalorder %s53, 7
      %p109 = por %p107, %p108
      %p110 = scmp.ne.s32.totalorder %s99, %s100
      %p111 = scmp.eq.s32.totalorder %s53, 0
      %p112 = por %p110, %p111
      %p113 = scmp.ne.s32.totalorder %s99, %s100
      %p114 = scmp.eq.s32.totalorder %s54, 7
      %p115 = por %p113, %p114
      %p117 = scmp.ne.s32.totalorder %s100, %s116
      %p118 = scmp.eq.s32.totalorder %s54, 0
      %p119 = por %p117, %p118
      %s121 = sadd.s32 %s120, 1
      %p124 = scmp.eq.s32.totalorder %s48, 7
      %p125 = scmp.ne.s32.totalorder %s120, %s122
      %p126 = scmp.eq.s32.totalorder %s48, 0
      %p127 = por %p125, %p126
      %p128 = scmp.ne.s32.totalorder %s120, %s122
      %p129 = scmp.eq.s32.totalorder %s53, 7
      %p130 = por %p128, %p129
      %p131 = scmp.ne.s32.totalorder %s122, %s123
      %p132 = scmp.eq.s32.totalorder %s53, 0
      %p133 = por %p131, %p132
      %p134 = scmp.ne.s32.totalorder %s122, %s123
      %p135 = scmp.eq.s32.totalorder %s54, 7
      %p136 = por %p134, %p135
      %p138 = scmp.ne.s32.totalorder %s123, %s137
      %p139 = scmp.eq.s32.totalorder %s54, 0
      %p140 = por %p138, %p139
      %s142 = sadd.s32 %s141, 1
      %p145 = scmp.eq.s32.totalorder %s48, 7
      %p146 = scmp.ne.s32.totalorder %s141, %s143
      %p147 = scmp.eq.s32.totalorder %s48, 0
      %p148 = por %p146, %p147
      %p149 = scmp.ne.s32.totalorder %s141, %s143
      %p150 = scmp.eq.s32.totalorder %s53, 7
      %p151 = por %p149, %p150
      %p152 = scmp.ne.s32.totalorder %s143, %s144
      %p153 = scmp.eq.s32.totalorder %s53, 0
      %p154 = por %p152, %p153
      %p155 = scmp.ne.s32.totalorder %s143, %s144
      %p156 = scmp.eq.s32.totalorder %s54, 7
      %p157 = por %p155, %p156
      %p159 = scmp.ne.s32.totalorder %s144, %s158
      %p160 = scmp.eq.s32.totalorder %s54, 0
      %p161 = por %p159, %p160
      %s162 = ssub.s32 %s56, %s63
      %p163 = scmp.eq.s32.totalorder %s162, 0
      %s165 = sadd.s32 %s164, 1
      %s166 = scalar_select %p163, %s164, %s165
      %p169 = pneg %p163
      %p170 = scmp.eq.s32.totalorder %s48, 7
      %p171 = por %p169, %p170
      %p172 = scmp.ne.s32.totalorder %s164, %s167
      %p173 = scmp.eq.s32.totalorder %s48, 0
      %p174 = por %p172, %p173
      %p175 = scmp.ne.s32.totalorder %s164, %s167
      %p176 = scmp.eq.s32.totalorder %s53, 7
      %p177 = por %p175, %p176
      %p178 = scmp.ne.s32.totalorder %s167, %s168
      %p179 = scmp.eq.s32.totalorder %s53, 0
      %p180 = por %p178, %p179
      %p181 = scmp.ne.s32.totalorder %s167, %s168
      %p182 = scmp.eq.s32.totalorder %s54, 7
      %p183 = por %p181, %p182
      %p185 = scmp.ne.s32.totalorder %s168, %s184
      %p186 = scmp.eq.s32.totalorder %s54, 0
      %p187 = por %p185, %p186
      %s188 = ssub.s32 %s56, %s63
      %p189 = scmp.eq.s32.totalorder %s188, 0
      %s191 = sadd.s32 %s190, 1
      %s192 = scalar_select %p189, %s190, %s191
      %p195 = pneg %p189
      %p196 = scmp.eq.s32.totalorder %s48, 7
      %p197 = por %p195, %p196
      %p198 = scmp.ne.s32.totalorder %s190, %s193
      %p199 = scmp.eq.s32.totalorder %s48, 0
      %p200 = por %p198, %p199
      %p201 = scmp.ne.s32.totalorder %s190, %s193
      %p202 = scmp.eq.s32.totalorder %s53, 7
      %p203 = por %p201, %p202
      %p204 = scmp.ne.s32.totalorder %s193, %s194
      %p205 = scmp.eq.s32.totalorder %s53, 0
      %p206 = por %p204, %p205
      %p207 = scmp.ne.s32.totalorder %s193, %s194
      %p208 = scmp.eq.s32.totalorder %s54, 7
      %p209 = por %p207, %p208
      %p211 = scmp.ne.s32.totalorder %s194, %s210
      %p212 = scmp.eq.s32.totalorder %s54, 0
      %p213 = por %p211, %p212
      %s214 = ssub.s32 %s56, %s63
      %p215 = scmp.eq.s32.totalorder %s214, 0
      %s217 = sadd.s32 %s216, 1
      %s218 = scalar_select %p215, %s216, %s217
      %p221 = pneg %p215
      %p222 = scmp.eq.s32.totalorder %s48, 7
      %p223 = por %p221, %p222
      %p224 = scmp.ne.s32.totalorder %s216, %s219
      %p225 = scmp.eq.s32.totalorder %s48, 0
      %p226 = por %p224, %p225
      %p227 = scmp.ne.s32.totalorder %s216, %s219
      %p228 = scmp.eq.s32.totalorder %s53, 7
      %p229 = por %p227, %p228
      %p230 = scmp.ne.s32.totalorder %s219, %s220
      %p231 = scmp.eq.s32.totalorder %s53, 0
      %p232 = por %p230, %p231
      %p233 = scmp.ne.s32.totalorder %s219, %s220
      %p234 = scmp.eq.s32.totalorder %s54, 7
      %p235 = por %p233, %p234
      %p237 = scmp.ne.s32.totalorder %s220, %s236
      %p238 = scmp.eq.s32.totalorder %s54, 0
      %p239 = por %p237, %p238
      %s240 = ssub.s32 %s56, %s63
      %p241 = scmp.eq.s32.totalorder %s240, 0
      %s243 = sadd.s32 %s242, 1
      %s244 = scalar_select %p241, %s242, %s243
      %p247 = pneg %p241
      %p248 = scmp.eq.s32.totalorder %s48, 7
      %p249 = por %p247, %p248
      %p250 = scmp.ne.s32.totalorder %s242, %s245
      %p251 = scmp.eq.s32.totalorder %s48, 0
      %p252 = por %p250, %p251
      %p253 = scmp.ne.s32.totalorder %s242, %s245
      %p254 = scmp.eq.s32.totalorder %s53, 7
      %p255 = por %p253, %p254
      %p256 = scmp.ne.s32.totalorder %s245, %s246
      %p257 = scmp.eq.s32.totalorder %s53, 0
      %p258 = por %p256, %p257
      %p259 = scmp.ne.s32.totalorder %s245, %s246
      %p260 = scmp.eq.s32.totalorder %s54, 7
      %p261 = por %p259, %p260
      %p263 = scmp.ne.s32.totalorder %s246, %s262
      %p264 = scmp.eq.s32.totalorder %s54, 0
      %p265 = por %p263, %p264
      %s266 = ssub.s32 %s56, %s63
      %p267 = scmp.eq.s32.totalorder %s266, 0
      %s269 = sadd.s32 %s268, 1
      %s270 = scalar_select %p267, %s268, %s269
      %p273 = pneg %p267
      %p274 = scmp.eq.s32.totalorder %s48, 7
      %p275 = por %p273, %p274
      %p276 = scmp.ne.s32.totalorder %s268, %s271
      %p277 = scmp.eq.s32.totalorder %s48, 0
      %p278 = por %p276, %p277
      %p279 = scmp.ne.s32.totalorder %s268, %s271
      %p280 = scmp.eq.s32.totalorder %s53, 7
      %p281 = por %p279, %p280
      %p282 = scmp.ne.s32.totalorder %s271, %s272
      %p283 = scmp.eq.s32.totalorder %s53, 0
      %p284 = por %p282, %p283
      %p285 = scmp.ne.s32.totalorder %s271, %s272
      %p286 = scmp.eq.s32.totalorder %s54, 7
      %p287 = por %p285, %p286
      %p289 = scmp.ne.s32.totalorder %s272, %s288
      %p290 = scmp.eq.s32.totalorder %s54, 0
      %p291 = por %p289, %p290
      %s292 = ssub.s32 %s56, %s63
      %p293 = scmp.eq.s32.totalorder %s292, 0
      %s295 = sadd.s32 %s294, 1
      %s296 = scalar_select %p293, %s294, %s295
      %p299 = pneg %p293
      %p300 = scmp.eq.s32.totalorder %s48, 7
      %p301 = por %p299, %p300
      %p302 = scmp.ne.s32.totalorder %s294, %s297
      %p303 = scmp.eq.s32.totalorder %s48, 0
      %p304 = por %p302, %p303
      %p305 = scmp.ne.s32.totalorder %s294, %s297
      %p306 = scmp.eq.s32.totalorder %s53, 7
      %p307 = por %p305, %p306
      %p308 = scmp.ne.s32.totalorder %s297, %s298
      %p309 = scmp.eq.s32.totalorder %s53, 0
      %p310 = por %p308, %p309
      %p311 = scmp.ne.s32.totalorder %s297, %s298
      %p312 = scmp.eq.s32.totalorder %s54, 7
      %p313 = por %p311, %p312
      %p315 = scmp.ne.s32.totalorder %s298, %s314
      %p316 = scmp.eq.s32.totalorder %s54, 0
      %p317 = por %p315, %p316
      %s318 = ssub.s32 %s56, %s63
      %p319 = scmp.eq.s32.totalorder %s318, 0
      %s321 = sadd.s32 %s320, 1
      %s322 = scalar_select %p319, %s320, %s321
      %p325 = pneg %p319
      %p326 = scmp.eq.s32.totalorder %s48, 7
      %p327 = por %p325, %p326
      %p328 = scmp.ne.s32.totalorder %s320, %s323
      %p329 = scmp.eq.s32.totalorder %s48, 0
      %p330 = por %p328, %p329
      %p331 = scmp.ne.s32.totalorder %s320, %s323
      %p332 = scmp.eq.s32.totalorder %s53, 7
      %p333 = por %p331, %p332
      %p334 = scmp.ne.s32.totalorder %s323, %s324
      %p335 = scmp.eq.s32.totalorder %s53, 0
      %p336 = por %p334, %p335
      %p337 = scmp.ne.s32.totalorder %s323, %s324
      %p338 = scmp.eq.s32.totalorder %s54, 7
      %p339 = por %p337, %p338
      %p341 = scmp.ne.s32.totalorder %s324, %s340
      %p342 = scmp.eq.s32.totalorder %s54, 0
      %p343 = por %p341, %p342
      %s344 = ssub.s32 %s56, %s63
      %p345 = scmp.eq.s32.totalorder %s344, 0
      %s347 = sadd.s32 %s346, 1
      %s348 = scalar_select %p345, %s346, %s347
      %p351 = pneg %p345
      %p352 = scmp.eq.s32.totalorder %s48, 7
      %p353 = por %p351, %p352
      %p354 = scmp.ne.s32.totalorder %s346, %s349
      %p355 = scmp.eq.s32.totalorder %s48, 0
      %p356 = por %p354, %p355
      %p357 = scmp.ne.s32.totalorder %s346, %s349
      %p358 = scmp.eq.s32.totalorder %s53, 7
      %p359 = por %p357, %p358
      %p360 = scmp.ne.s32.totalorder %s349, %s350
      %p361 = scmp.eq.s32.totalorder %s53, 0
      %p362 = por %p360, %p361
      %p363 = scmp.ne.s32.totalorder %s349, %s350
      %p364 = scmp.eq.s32.totalorder %s54, 7
      %p365 = por %p363, %p364
      %p367 = scmp.ne.s32.totalorder %s350, %s366
      %p368 = scmp.eq.s32.totalorder %s54, 0
      %p369 = por %p367, %p368
      %s370 = ssub.s32 %s56, %s63
      %p371 = scmp.eq.s32.totalorder %s370, 0
      %s373 = sadd.s32 %s372, 1
      %s374 = scalar_select %p371, %s372, %s373
      %p377 = pneg %p371
      %p378 = scmp.eq.s32.totalorder %s48, 7
      %p379 = por %p377, %p378
      %p380 = scmp.ne.s32.totalorder %s372, %s375
      %p381 = scmp.eq.s32.totalorder %s48, 0
      %p382 = por %p380, %p381
      %p383 = scmp.ne.s32.totalorder %s372, %s375
      %p384 = scmp.eq.s32.totalorder %s53, 7
      %p385 = por %p383, %p384
      %p386 = scmp.ne.s32.totalorder %s375, %s376
      %p387 = scmp.eq.s32.totalorder %s53, 0
      %p388 = por %p386, %p387
      %p389 = scmp.ne.s32.totalorder %s375, %s376
      %p390 = scmp.eq.s32.totalorder %s54, 7
      %p391 = por %p389, %p390
      %p393 = scmp.ne.s32.totalorder %s376, %s392
      %p394 = scmp.eq.s32.totalorder %s54, 0
      %p395 = por %p393, %p394
      %s396 = ssub.s32 %s56, %s63
      %p397 = scmp.eq.s32.totalorder %s396, 0
      %s399 = sadd.s32 %s398, 1
      %s400 = scalar_select %p397, %s398, %s399
      %p403 = pneg %p397
      %p404 = scmp.eq.s32.totalorder %s48, 7
      %p405 = por %p403, %p404
      %p406 = scmp.ne.s32.totalorder %s398, %s401
      %p407 = scmp.eq.s32.totalorder %s48, 0
      %p408 = por %p406, %p407
      %p409 = scmp.ne.s32.totalorder %s398, %s401
      %p410 = scmp.eq.s32.totalorder %s53, 7
      %p411 = por %p409, %p410
      %p412 = scmp.ne.s32.totalorder %s401, %s402
      %p413 = scmp.eq.s32.totalorder %s53, 0
      %p414 = por %p412, %p413
      %p415 = scmp.ne.s32.totalorder %s401, %s402
      %p416 = scmp.eq.s32.totalorder %s54, 7
      %p417 = por %p415, %p416
      %p419 = scmp.ne.s32.totalorder %s402, %s418
      %p420 = scmp.eq.s32.totalorder %s54, 0
      %p421 = por %p419, %p420
      %s422 = ssub.s32 %s56, %s63
      %p423 = scmp.eq.s32.totalorder %s422, 0
      %s425 = sadd.s32 %s424, 1
      %s426 = scalar_select %p423, %s424, %s425
      %p429 = pneg %p423
      %p430 = scmp.eq.s32.totalorder %s48, 7
      %p431 = por %p429, %p430
      %p432 = scmp.ne.s32.totalorder %s424, %s427
      %p433 = scmp.eq.s32.totalorder %s48, 0
      %p434 = por %p432, %p433
      %p435 = scmp.ne.s32.totalorder %s424, %s427
      %p436 = scmp.eq.s32.totalorder %s53, 7
      %p437 = por %p435, %p436
      %p438 = scmp.ne.s32.totalorder %s427, %s428
      %p439 = scmp.eq.s32.totalorder %s53, 0
      %p440 = por %p438, %p439
      %p441 = scmp.ne.s32.totalorder %s427, %s428
      %p442 = scmp.eq.s32.totalorder %s54, 7
      %p443 = por %p441, %p442
      %p445 = scmp.ne.s32.totalorder %s428, %s444
      %p446 = scmp.eq.s32.totalorder %s54, 0
      %p447 = por %p445, %p446
      %s448 = ssub.s32 %s56, %s63
      %p449 = scmp.eq.s32.totalorder %s448, 0
      %s451 = sadd.s32 %s450, 1
      %s452 = scalar_select %p449, %s450, %s451
      %p455 = pneg %p449
      %p456 = scmp.eq.s32.totalorder %s48, 7
      %p457 = por %p455, %p456
      %p458 = scmp.ne.s32.totalorder %s450, %s453
      %p459 = scmp.eq.s32.totalorder %s48, 0
      %p460 = por %p458, %p459
      %p461 = scmp.ne.s32.totalorder %s450, %s453
      %p462 = scmp.eq.s32.totalorder %s53, 7
      %p463 = por %p461, %p462
      %p464 = scmp.ne.s32.totalorder %s453, %s454
      %p465 = scmp.eq.s32.totalorder %s53, 0
      %p466 = por %p464, %p465
      %p467 = scmp.ne.s32.totalorder %s453, %s454
      %p468 = scmp.eq.s32.totalorder %s54, 7
      %p469 = por %p467, %p468
      %p471 = scmp.ne.s32.totalorder %s454, %s470
      %p472 = scmp.eq.s32.totalorder %s54, 0
      %p473 = por %p471, %p472
      %s475 = sadd.s32 %s474, 1
      %p478 = scmp.eq.s32.totalorder %s48, 7
      %p479 = scmp.ne.s32.totalorder %s474, %s476
      %p480 = scmp.eq.s32.totalorder %s48, 0
      %p481 = por %p479, %p480
      %p482 = scmp.ne.s32.totalorder %s474, %s476
      %p483 = scmp.eq.s32.totalorder %s53, 7
      %p484 = por %p482, %p483
      %p485 = scmp.ne.s32.totalorder %s476, %s477
      %p486 = scmp.eq.s32.totalorder %s53, 0
      %p487 = por %p485, %p486
      %p488 = scmp.ne.s32.totalorder %s476, %s477
      %p489 = scmp.eq.s32.totalorder %s54, 7
      %p490 = por %p488, %p489
      %p492 = scmp.ne.s32.totalorder %s477, %s491
      %p493 = scmp.eq.s32.totalorder %s54, 0
      %p494 = por %p492, %p493
      %s496 = sadd.s32 %s495, 1
      %p499 = scmp.eq.s32.totalorder %s48, 7
      %p500 = scmp.ne.s32.totalorder %s495, %s497
      %p501 = scmp.eq.s32.totalorder %s48, 0
      %p502 = por %p500, %p501
      %p503 = scmp.ne.s32.totalorder %s495, %s497
      %p504 = scmp.eq.s32.totalorder %s53, 7
      %p505 = por %p503, %p504
      %p506 = scmp.ne.s32.totalorder %s497, %s498
      %p507 = scmp.eq.s32.totalorder %s53, 0
      %p508 = por %p506, %p507
      %p509 = scmp.ne.s32.totalorder %s497, %s498
      %p510 = scmp.eq.s32.totalorder %s54, 7
      %p511 = por %p509, %p510
      %p513 = scmp.ne.s32.totalorder %s498, %s512
      %p514 = scmp.eq.s32.totalorder %s54, 0
      %p515 = por %p513, %p514
      %s517 = sadd.s32 %s516, 1
      %p520 = scmp.eq.s32.totalorder %s48, 7
      %p521 = scmp.ne.s32.totalorder %s516, %s518
      %p522 = scmp.eq.s32.totalorder %s48, 0
      %p523 = por %p521, %p522
      %p524 = scmp.ne.s32.totalorder %s516, %s518
      %p525 = scmp.eq.s32.totalorder %s53, 7
      %p526 = por %p524, %p525
      %p527 = scmp.ne.s32.totalorder %s518, %s519
      %p528 = scmp.eq.s32.totalorder %s53, 0
      %p529 = por %p527, %p528
      %p530 = scmp.ne.s32.totalorder %s518, %s519
      %p531 = scmp.eq.s32.totalorder %s54, 7
      %p532 = por %p530, %p531
      %p534 = scmp.ne.s32.totalorder %s519, %s533
      %p535 = scmp.eq.s32.totalorder %s54, 0
      %p536 = por %p534, %p535
      %s538 = sadd.s32 %s537, 1
      %p541 = scmp.eq.s32.totalorder %s48, 7
      %p542 = scmp.ne.s32.totalorder %s537, %s539
      %p543 = scmp.eq.s32.totalorder %s48, 0
      %p544 = por %p542, %p543
      %p545 = scmp.ne.s32.totalorder %s537, %s539
      %p546 = scmp.eq.s32.totalorder %s53, 7
      %p547 = por %p545, %p546
      %p548 = scmp.ne.s32.totalorder %s539, %s540
      %p549 = scmp.eq.s32.totalorder %s53, 0
      %p550 = por %p548, %p549
      %p551 = scmp.ne.s32.totalorder %s539, %s540
      %p552 = scmp.eq.s32.totalorder %s54, 7
      %p553 = por %p551, %p552
      %p555 = scmp.ne.s32.totalorder %s540, %s554
      %p556 = scmp.eq.s32.totalorder %s54, 0
      %p557 = por %p555, %p556
      %s558 = ssub.s32 %s55, %s67
      %p559 = scmp.eq.s32.totalorder %s558, 0
      %s561 = sadd.s32 %s560, 1
      %s562 = scalar_select %p559, %s560, %s561
      %p565 = pneg %p559
      %p566 = scmp.eq.s32.totalorder %s48, 7
      %p567 = por %p565, %p566
      %p568 = scmp.ne.s32.totalorder %s560, %s563
      %p569 = scmp.eq.s32.totalorder %s48, 0
      %p570 = por %p568, %p569
      %p571 = scmp.ne.s32.totalorder %s560, %s563
      %p572 = scmp.eq.s32.totalorder %s53, 7
      %p573 = por %p571, %p572
      %p574 = scmp.ne.s32.totalorder %s563, %s564
      %p575 = scmp.eq.s32.totalorder %s53, 0
      %p576 = por %p574, %p575
      %p577 = scmp.ne.s32.totalorder %s563, %s564
      %p578 = scmp.eq.s32.totalorder %s54, 7
      %p579 = por %p577, %p578
      %p581 = scmp.ne.s32.totalorder %s564, %s580
      %p582 = scmp.eq.s32.totalorder %s54, 0
      %p583 = por %p581, %p582
      %p584 = scmp.le.s32.totalorder 1, %s48
      %p585 = scmp.lt.s32.totalorder %s48, 9
      %p586 = pnand %p584, %p585
      %p587 = pneg %p586
      // Predicated region
      $region9: #{tpu_custom_call.1} parent=5 // pred_check
        _
      $region10: #{tpu_custom_call.1} parent=5 // pred_check_branch
        %589 = sbr.rel (%p586) target = $region12
      $region11: #{tpu_custom_call.1} parent=5 // pred_region
        %s590 = ssub.s32 %s48, 1
        // Predicated region
        $region13: #{tpu_custom_call.1} parent=11 // pred_check
          %p591 = pneg %p133
        $region14: #{tpu_custom_call.1} parent=11 // pred_check_branch
          %593 = sbr.rel (%p591) target = $region16
        $region15: #{tpu_custom_call.1} parent=11 // pred_region
          %s595 = ssub.s32 16, 16
          %596 = vsyncadd [#allocation7], %s595
          %s598 = sshll.u32 [#allocation6], 4
          %s599 = int_to_ptr.vmem [resolvable:$true] %s598
          %601 = dma.hbm_to_vmem [thread:$0]  %s2, 16, %s599, [#allocation7]
        $region16: #{tpu_custom_call.1} parent=11 // pred_fallthru
          _
        // Predicated region
        $region17: #{tpu_custom_call.1} parent=11 // pred_check
          %p602 = pneg %p154
        $region18: #{tpu_custom_call.1} parent=11 // pred_check_branch
          %604 = sbr.rel (%p602) target = $region20
        $region19: #{tpu_custom_call.1} parent=11 // pred_region
          %s606 = ssub.s32 16, 16
          %607 = vsyncadd [#allocation7], %s606
          %s609 = sshll.u32 [#allocation8], 4
          %s610 = int_to_ptr.vmem [resolvable:$true] %s609
          %612 = dma.hbm_to_vmem [thread:$0]  %s3, 16, %s610, [#allocation7]
        $region20: #{tpu_custom_call.1} parent=11 // pred_fallthru
          _
        // Predicated region
        $region21: #{tpu_custom_call.1} parent=11 // pred_check
          %p613 = pneg %p487
        $region22: #{tpu_custom_call.1} parent=11 // pred_check_branch
          %615 = sbr.rel (%p613) target = $region24
        $region23: #{tpu_custom_call.1} parent=11 // pred_region
          _
        $region24: #{tpu_custom_call.1} parent=11 // pred_fallthru
          _
        // Predicated region
        $region25: #{tpu_custom_call.1} parent=11 // pred_check
          %p616 = pneg %p508
        $region26: #{tpu_custom_call.1} parent=11 // pred_check_branch
          %618 = sbr.rel (%p616) target = $region28
        $region27: #{tpu_custom_call.1} parent=11 // pred_region
          %s620 = ssub.s32 16, 16
          %621 = vsyncadd [#allocation22], %s620
          %s623 = sshll.u32 [#allocation23], 4
          %s624 = int_to_ptr.vmem [resolvable:$true] %s623
          %626 = dma.hbm_to_vmem [thread:$0]  %s17, 16, %s624, [#allocation22]
        $region28: #{tpu_custom_call.1} parent=11 // pred_fallthru
          _
        // Predicated region
        $region29: #{tpu_custom_call.1} parent=11 // pred_check
          %p627 = pneg %p529
        $region30: #{tpu_custom_call.1} parent=11 // pred_check_branch
          %629 = sbr.rel (%p627) target = $region32
        $region31: #{tpu_custom_call.1} parent=11 // pred_region
          _
        $region32: #{tpu_custom_call.1} parent=11 // pred_fallthru
          _
        // Predicated region
        $region33: #{tpu_custom_call.1} parent=11 // pred_check
          %p630 = pneg %p550
        $region34: #{tpu_custom_call.1} parent=11 // pred_check_branch
          %632 = sbr.rel (%p630) target = $region36
        $region35: #{tpu_custom_call.1} parent=11 // pred_region
          _
        $region36: #{tpu_custom_call.1} parent=11 // pred_fallthru
          _
      $region12: #{tpu_custom_call.1} parent=5 // pred_fallthru
        _
      %p633 = scmp.lt.s32.totalorder %s48, 8
      // Predicated region
      $region37: #{tpu_custom_call.1} parent=5 // pred_check
        %p634 = pneg %p633
      $region38: #{tpu_custom_call.1} parent=5 // pred_check_branch
        %636 = sbr.rel (%p634) target = $region40
      $region39: #{tpu_custom_call.1} parent=5 // pred_region
        // Predicated region
        $region41: #{tpu_custom_call.1} parent=39 // pred_check
          %p637 = pneg %p80
        $region42: #{tpu_custom_call.1} parent=39 // pred_check_branch
          %639 = sbr.rel (%p637) target = $region44
        $region43: #{tpu_custom_call.1} parent=39 // pred_region
          %p640 = scmp.lt.s32.totalorder %s55, 3
          %s641 = scalar_select %p640, %s55, 3
          %s642 = smul.addr %s641, 8
          %s643 = scalar_lea.vmem %s0, %s642
        $region44: #{tpu_custom_call.1} parent=39 // pred_fallthru
          _
        // Predicated region
        $region45: #{tpu_custom_call.1} parent=39 // pred_check
          %p644 = pneg %p106
        $region46: #{tpu_custom_call.1} parent=39 // pred_check_branch
          %646 = sbr.rel (%p644) target = $region48
        $region47: #{tpu_custom_call.1} parent=39 // pred_region
          %s647 = sand.u32 %s96, 1
          %s648 = scalar_lea.sflag [#allocation4], %s647
          %s649 = sand.u32 %s96, 1
          %s650 = scalar_lea.vmem [#allocation3], %s649
          %s652 = ssub.s32 16, 16
          %653 = vsyncadd %s648, %s652
          %s654 = smul.addr %s55, 16
          %s655 = scalar_lea.hbm %s1, %s654
          %s657 = sshll.u32 %s650, 4
          %s658 = int_to_ptr.vmem [resolvable:$true] %s657
          %660 = dma.hbm_to_vmem [thread:$0]  %s655, 16, %s658, %s648
        $region48: #{tpu_custom_call.1} parent=39 // pred_fallthru
          _
        // Predicated region
        $region49: #{tpu_custom_call.1} parent=39 // pred_check
          %p661 = pneg %p174
        $region50: #{tpu_custom_call.1} parent=39 // pred_check_branch
          %663 = sbr.rel (%p661) target = $region52
        $region51: #{tpu_custom_call.1} parent=39 // pred_region
          %p664 = scmp.lt.s32.totalorder %s56, 1
          %s665 = scalar_select %p664, %s56, 1
          %s666 = smul.addr %s665, 4
          %s667 = smul.addr %s666, 4
          %s668 = scalar_lea.vmem %s4, %s667
        $region52: #{tpu_custom_call.1} parent=39 // pred_fallthru
          _
        // Predicated region
        $region53: #{tpu_custom_call.1} parent=39 // pred_check
          %p669 = pneg %p200
        $region54: #{tpu_custom_call.1} parent=39 // pred_check_branch
          %671 = sbr.rel (%p669) target = $region56
        $region55: #{tpu_custom_call.1} parent=39 // pred_region
          %s672 = sand.u32 %s48, 1
          %s673 = scalar_lea.sflag [#allocation10], %s672
          %s674 = sand.u32 %s190, 1
          %s675 = scalar_lea.vmem [#allocation9], %s674
          %s677 = ssub.s32 16, 16
          %678 = vsyncadd %s673, %s677
          %s679 = smul.addr %s56, 16
          %s680 = scalar_lea.hbm %s5, %s679
          %s682 = sshll.u32 %s675, 4
          %s683 = int_to_ptr.vmem [resolvable:$true] %s682
          %685 = dma.hbm_to_vmem [thread:$0]  %s680, 16, %s683, %s673
        $region56: #{tpu_custom_call.1} parent=39 // pred_fallthru
          _
        // Predicated region
        $region57: #{tpu_custom_call.1} parent=39 // pred_check
          %p686 = pneg %p226
        $region58: #{tpu_custom_call.1} parent=39 // pred_check_branch
          %688 = sbr.rel (%p686) target = $region60
        $region59: #{tpu_custom_call.1} parent=39 // pred_region
          %p689 = scmp.lt.s32.totalorder %s56, 1
          %s690 = scalar_select %p689, %s56, 1
          %s691 = smul.addr %s690, 4
          %s692 = smul.addr %s691, 4
          %s693 = scalar_lea.vmem %s6, %s692
        $region60: #{tpu_custom_call.1} parent=39 // pred_fallthru
          _
        // Predicated region
        $region61: #{tpu_custom_call.1} parent=39 // pred_check
          %p694 = pneg %p252
        $region62: #{tpu_custom_call.1} parent=39 // pred_check_branch
          %696 = sbr.rel (%p694) target = $region64
        $region63: #{tpu_custom_call.1} parent=39 // pred_region
          %s697 = sand.u32 %s48, 1
          %s698 = scalar_lea.sflag [#allocation10], %s697
          %s699 = sand.u32 %s242, 1
          %s700 = scalar_lea.vmem [#allocation11], %s699
          %s702 = ssub.s32 16, 16
          %703 = vsyncadd %s698, %s702
          %s704 = smul.addr %s56, 16
          %s705 = scalar_lea.hbm %s7, %s704
          %s707 = sshll.u32 %s700, 4
          %s708 = int_to_ptr.vmem [resolvable:$true] %s707
          %710 = dma.hbm_to_vmem [thread:$0]  %s705, 16, %s708, %s698
        $region64: #{tpu_custom_call.1} parent=39 // pred_fallthru
          _
        // Predicated region
        $region65: #{tpu_custom_call.1} parent=39 // pred_check
          %p711 = pneg %p278
        $region66: #{tpu_custom_call.1} parent=39 // pred_check_branch
          %713 = sbr.rel (%p711) target = $region68
        $region67: #{tpu_custom_call.1} parent=39 // pred_region
          %s714 = sand.u32 %s48, 1
          %s715 = scalar_lea.sflag [#allocation13], %s714
          %s716 = sand.u32 %s268, 1
          %s717 = scalar_lea.vmem [#allocation12], %s716
          %s719 = ssub.s32 16, 16
          %720 = vsyncadd %s715, %s719
          %s721 = smul.addr %s56, 16
          %s722 = scalar_lea.hbm %s8, %s721
          %s724 = sshll.u32 %s717, 4
          %s725 = int_to_ptr.vmem [resolvable:$true] %s724
          %727 = dma.hbm_to_vmem [thread:$0]  %s722, 16, %s725, %s715
        $region68: #{tpu_custom_call.1} parent=39 // pred_fallthru
          _
        // Predicated region
        $region69: #{tpu_custom_call.1} parent=39 // pred_check
          %p728 = pneg %p304
        $region70: #{tpu_custom_call.1} parent=39 // pred_check_branch
          %730 = sbr.rel (%p728) target = $region72
        $region71: #{tpu_custom_call.1} parent=39 // pred_region
          %s731 = sand.u32 %s48, 1
          %s732 = scalar_lea.sflag [#allocation13], %s731
          %s733 = sand.u32 %s294, 1
          %s734 = scalar_lea.vmem [#allocation14], %s733
          %s736 = ssub.s32 16, 16
          %737 = vsyncadd %s732, %s736
          %s738 = smul.addr %s56, 16
          %s739 = scalar_lea.hbm %s9, %s738
          %s741 = sshll.u32 %s734, 4
          %s742 = int_to_ptr.vmem [resolvable:$true] %s741
          %744 = dma.hbm_to_vmem [thread:$0]  %s739, 16, %s742, %s732
        $region72: #{tpu_custom_call.1} parent=39 // pred_fallthru
          _
        // Predicated region
        $region73: #{tpu_custom_call.1} parent=39 // pred_check
          %p745 = pneg %p330
        $region74: #{tpu_custom_call.1} parent=39 // pred_check_branch
          %747 = sbr.rel (%p745) target = $region76
        $region75: #{tpu_custom_call.1} parent=39 // pred_region
          %s748 = sand.u32 %s48, 1
          %s749 = scalar_lea.sflag [#allocation16], %s748
          %s750 = sand.u32 %s320, 1
          %s751 = smul.addr %s750, 16
          %s752 = scalar_lea.vmem [#allocation15], %s751
          %s754 = ssub.s32 256, 256
          %755 = vsyncadd %s749, %s754
          %s756 = smul.addr %s56, 4
          %s757 = smul.addr %s756, 64
          %s758 = scalar_lea.hbm %s10, %s757
          %s759 = sshll.u32 %s752, 4
          %s760 = int_to_ptr.vmem [resolvable:$true] %s759
          %765 = dma.hbm_to_vmem [thread:$0]  %s758, 256, %s760, %s749, 64, 64, 4
        $region76: #{tpu_custom_call.1} parent=39 // pred_fallthru
          _
        // Predicated region
        $region77: #{tpu_custom_call.1} parent=39 // pred_check
          %p766 = pneg %p356
        $region78: #{tpu_custom_call.1} parent=39 // pred_check_branch
          %768 = sbr.rel (%p766) target = $region80
        $region79: #{tpu_custom_call.1} parent=39 // pred_region
          %s769 = sand.u32 %s48, 1
          %s770 = scalar_lea.sflag [#allocation16], %s769
          %s771 = sand.u32 %s346, 1
          %s772 = scalar_lea.vmem [#allocation17], %s771
          %s774 = ssub.s32 16, 16
          %775 = vsyncadd %s770, %s774
          %s776 = smul.addr %s56, 16
          %s777 = scalar_lea.hbm %s11, %s776
          %s779 = sshll.u32 %s772, 4
          %s780 = int_to_ptr.vmem [resolvable:$true] %s779
          %782 = dma.hbm_to_vmem [thread:$0]  %s777, 16, %s780, %s770
        $region80: #{tpu_custom_call.1} parent=39 // pred_fallthru
          _
        // Predicated region
        $region81: #{tpu_custom_call.1} parent=39 // pred_check
          %p783 = pneg %p382
        $region82: #{tpu_custom_call.1} parent=39 // pred_check_branch
          %785 = sbr.rel (%p783) target = $region84
        $region83: #{tpu_custom_call.1} parent=39 // pred_region
          %p786 = scmp.lt.s32.totalorder %s56, 1
          %s787 = scalar_select %p786, %s56, 1
          %s788 = smul.addr %s787, 8
          %s789 = smul.addr %s788, 4
          %s790 = scalar_lea.vmem %s12, %s789
        $region84: #{tpu_custom_call.1} parent=39 // pred_fallthru
          _
        // Predicated region
        $region85: #{tpu_custom_call.1} parent=39 // pred_check
          %p791 = pneg %p408
        $region86: #{tpu_custom_call.1} parent=39 // pred_check_branch
          %793 = sbr.rel (%p791) target = $region88
        $region87: #{tpu_custom_call.1} parent=39 // pred_region
          %s794 = sand.u32 %s48, 1
          %s795 = scalar_lea.sflag [#allocation19], %s794
          %s796 = sand.u32 %s398, 1
          %s797 = scalar_lea.vmem [#allocation18], %s796
          %s799 = ssub.s32 16, 16
          %800 = vsyncadd %s795, %s799
          %s801 = smul.addr %s56, 16
          %s802 = scalar_lea.hbm %s13, %s801
          %s804 = sshll.u32 %s797, 4
          %s805 = int_to_ptr.vmem [resolvable:$true] %s804
          %807 = dma.hbm_to_vmem [thread:$0]  %s802, 16, %s805, %s795
        $region88: #{tpu_custom_call.1} parent=39 // pred_fallthru
          _
        // Predicated region
        $region89: #{tpu_custom_call.1} parent=39 // pred_check
          %p808 = pneg %p434
        $region90: #{tpu_custom_call.1} parent=39 // pred_check_branch
          %810 = sbr.rel (%p808) target = $region92
        $region91: #{tpu_custom_call.1} parent=39 // pred_region
          %s811 = sand.u32 %s48, 1
          %s812 = scalar_lea.sflag [#allocation19], %s811
          %s813 = sand.u32 %s424, 1
          %s814 = scalar_lea.vmem [#allocation20], %s813
          %s816 = ssub.s32 16, 16
          %817 = vsyncadd %s812, %s816
          %s818 = smul.addr %s56, 16
          %s819 = scalar_lea.hbm %s14, %s818
          %s821 = sshll.u32 %s814, 4
          %s822 = int_to_ptr.vmem [resolvable:$true] %s821
          %824 = dma.hbm_to_vmem [thread:$0]  %s819, 16, %s822, %s812
        $region92: #{tpu_custom_call.1} parent=39 // pred_fallthru
          _
        // Predicated region
        $region93: #{tpu_custom_call.1} parent=39 // pred_check
          %p825 = pneg %p460
        $region94: #{tpu_custom_call.1} parent=39 // pred_check_branch
          %827 = sbr.rel (%p825) target = $region96
        $region95: #{tpu_custom_call.1} parent=39 // pred_region
          %s828 = sand.u32 %s48, 1
          %s829 = scalar_lea.sflag [#allocation22], %s828
          %s830 = sand.u32 %s450, 1
          %s831 = scalar_lea.vmem [#allocation21], %s830
          %s833 = ssub.s32 16, 16
          %834 = vsyncadd %s829, %s833
          %s835 = smul.addr %s56, 16
          %s836 = scalar_lea.hbm %s15, %s835
          %s838 = sshll.u32 %s831, 4
          %s839 = int_to_ptr.vmem [resolvable:$true] %s838
          %841 = dma.hbm_to_vmem [thread:$0]  %s836, 16, %s839, %s829
        $region96: #{tpu_custom_call.1} parent=39 // pred_fallthru
          _
      $region40: #{tpu_custom_call.1} parent=5 // pred_fallthru
        _
      %p842 = scmp.le.s32.totalorder 1, %s48
      %p843 = scmp.lt.s32.totalorder %s48, 9
      %p844 = pnand %p842, %p843
      %p845 = pneg %p844
      // Predicated region
      $region97: #{tpu_custom_call.1} parent=5 // pred_check
        _
      $region98: #{tpu_custom_call.1} parent=5 // pred_check_branch
        %847 = sbr.rel (%p844) target = $region100
      $region99: #{tpu_custom_call.1} parent=5 // pred_region
        %s848 = ssub.s32 %s48, 1
        %s849 = sand.u32 %s99, 1
        %s850 = scalar_lea.sflag [#allocation4], %s849
        %s851 = sand.u32 %s99, 1
        %s852 = scalar_lea.vmem [#allocation3], %s851
        // Predicated region
        $region101: #{tpu_custom_call.1} parent=99 // pred_check
          %p853 = pneg %p112
        $region102: #{tpu_custom_call.1} parent=99 // pred_check_branch
          %855 = sbr.rel (%p853) target = $region104
        $region103: #{tpu_custom_call.1} parent=99 // pred_region
          %856 = dma.done %s850, 16
        $region104: #{tpu_custom_call.1} parent=99 // pred_fallthru
          _
        // Predicated region
        $region105: #{tpu_custom_call.1} parent=99 // pred_check
          %p857 = pneg %p133
        $region106: #{tpu_custom_call.1} parent=99 // pred_check_branch
          %859 = sbr.rel (%p857) target = $region108
        $region107: #{tpu_custom_call.1} parent=99 // pred_region
          %860 = dma.done [#allocation7], 16
        $region108: #{tpu_custom_call.1} parent=99 // pred_fallthru
          _
        // Predicated region
        $region109: #{tpu_custom_call.1} parent=99 // pred_check
          %p861 = pneg %p154
        $region110: #{tpu_custom_call.1} parent=99 // pred_check_branch
          %863 = sbr.rel (%p861) target = $region112
        $region111: #{tpu_custom_call.1} parent=99 // pred_region
          %864 = dma.done [#allocation7], 16
        $region112: #{tpu_custom_call.1} parent=99 // pred_fallthru
          _
        %s865 = sand.u32 %s53, 1
        %s866 = scalar_lea.sflag [#allocation10], %s865
        %s867 = sand.u32 %s193, 1
        %s868 = scalar_lea.vmem [#allocation9], %s867
        // Predicated region
        $region113: #{tpu_custom_call.1} parent=99 // pred_check
          %p869 = pneg %p206
        $region114: #{tpu_custom_call.1} parent=99 // pred_check_branch
          %871 = sbr.rel (%p869) target = $region116
        $region115: #{tpu_custom_call.1} parent=99 // pred_region
          %872 = dma.done %s866, 16
        $region116: #{tpu_custom_call.1} parent=99 // pred_fallthru
          _
        %s873 = sand.u32 %s53, 1
        %s874 = scalar_lea.sflag [#allocation10], %s873
        %s875 = sand.u32 %s245, 1
        %s876 = scalar_lea.vmem [#allocation11], %s875
        // Predicated region
        $region117: #{tpu_custom_call.1} parent=99 // pred_check
          %p877 = pneg %p258
        $region118: #{tpu_custom_call.1} parent=99 // pred_check_branch
          %879 = sbr.rel (%p877) target = $region120
        $region119: #{tpu_custom_call.1} parent=99 // pred_region
          %880 = dma.done %s874, 16
        $region120: #{tpu_custom_call.1} parent=99 // pred_fallthru
          _
        %s881 = sand.u32 %s53, 1
        %s882 = scalar_lea.sflag [#allocation13], %s881
        %s883 = sand.u32 %s271, 1
        %s884 = scalar_lea.vmem [#allocation12], %s883
        // Predicated region
        $region121: #{tpu_custom_call.1} parent=99 // pred_check
          %p885 = pneg %p284
        $region122: #{tpu_custom_call.1} parent=99 // pred_check_branch
          %887 = sbr.rel (%p885) target = $region124
        $region123: #{tpu_custom_call.1} parent=99 // pred_region
          %888 = dma.done %s882, 16
        $region124: #{tpu_custom_call.1} parent=99 // pred_fallthru
          _
        %s889 = sand.u32 %s53, 1
        %s890 = scalar_lea.sflag [#allocation13], %s889
        %s891 = sand.u32 %s297, 1
        %s892 = scalar_lea.vmem [#allocation14], %s891
        // Predicated region
        $region125: #{tpu_custom_call.1} parent=99 // pred_check
          %p893 = pneg %p310
        $region126: #{tpu_custom_call.1} parent=99 // pred_check_branch
          %895 = sbr.rel (%p893) target = $region128
        $region127: #{tpu_custom_call.1} parent=99 // pred_region
          %896 = dma.done %s890, 16
        $region128: #{tpu_custom_call.1} parent=99 // pred_fallthru
          _
        %s897 = sand.u32 %s53, 1
        %s898 = scalar_lea.sflag [#allocation16], %s897
        %s899 = sand.u32 %s323, 1
        %s900 = smul.addr %s899, 16
        %s901 = scalar_lea.vmem [#allocation15], %s900
        // Predicated region
        $region129: #{tpu_custom_call.1} parent=99 // pred_check
          %p902 = pneg %p336
        $region130: #{tpu_custom_call.1} parent=99 // pred_check_branch
          %904 = sbr.rel (%p902) target = $region132
        $region131: #{tpu_custom_call.1} parent=99 // pred_region
          %905 = dma.done %s898, 256
        $region132: #{tpu_custom_call.1} parent=99 // pred_fallthru
          _
        %s906 = sand.u32 %s53, 1
        %s907 = scalar_lea.sflag [#allocation16], %s906
        %s908 = sand.u32 %s349, 1
        %s909 = scalar_lea.vmem [#allocation17], %s908
        // Predicated region
        $region133: #{tpu_custom_call.1} parent=99 // pred_check
          %p910 = pneg %p362
        $region134: #{tpu_custom_call.1} parent=99 // pred_check_branch
          %912 = sbr.rel (%p910) target = $region136
        $region135: #{tpu_custom_call.1} parent=99 // pred_region
          %913 = dma.done %s907, 16
        $region136: #{tpu_custom_call.1} parent=99 // pred_fallthru
          _
        %s914 = sand.u32 %s53, 1
        %s915 = scalar_lea.sflag [#allocation19], %s914
        %s916 = sand.u32 %s401, 1
        %s917 = scalar_lea.vmem [#allocation18], %s916
        // Predicated region
        $region137: #{tpu_custom_call.1} parent=99 // pred_check
          %p918 = pneg %p414
        $region138: #{tpu_custom_call.1} parent=99 // pred_check_branch
          %920 = sbr.rel (%p918) target = $region140
        $region139: #{tpu_custom_call.1} parent=99 // pred_region
          %921 = dma.done %s915, 16
        $region140: #{tpu_custom_call.1} parent=99 // pred_fallthru
          _
        %s922 = sand.u32 %s53, 1
        %s923 = scalar_lea.sflag [#allocation19], %s922
        %s924 = sand.u32 %s427, 1
        %s925 = scalar_lea.vmem [#allocation20], %s924
        // Predicated region
        $region141: #{tpu_custom_call.1} parent=99 // pred_check
          %p926 = pneg %p440
        $region142: #{tpu_custom_call.1} parent=99 // pred_check_branch
          %928 = sbr.rel (%p926) target = $region144
        $region143: #{tpu_custom_call.1} parent=99 // pred_region
          %929 = dma.done %s923, 16
        $region144: #{tpu_custom_call.1} parent=99 // pred_fallthru
          _
        %s930 = sand.u32 %s53, 1
        %s931 = scalar_lea.sflag [#allocation22], %s930
        %s932 = sand.u32 %s453, 1
        %s933 = scalar_lea.vmem [#allocation21], %s932
        // Predicated region
        $region145: #{tpu_custom_call.1} parent=99 // pred_check
          %p934 = pneg %p466
        $region146: #{tpu_custom_call.1} parent=99 // pred_check_branch
          %936 = sbr.rel (%p934) target = $region148
        $region147: #{tpu_custom_call.1} parent=99 // pred_region
          %937 = dma.done %s931, 16
        $region148: #{tpu_custom_call.1} parent=99 // pred_fallthru
          _
        // Predicated region
        $region149: #{tpu_custom_call.1} parent=99 // pred_check
          %p938 = pneg %p508
        $region150: #{tpu_custom_call.1} parent=99 // pred_check_branch
          %940 = sbr.rel (%p938) target = $region152
        $region151: #{tpu_custom_call.1} parent=99 // pred_region
          %941 = dma.done [#allocation22], 16
        $region152: #{tpu_custom_call.1} parent=99 // pred_fallthru
          _
        %p942 = scmp.lt.s32.totalorder %s57, 3
        %s943 = scalar_select %p942, %s57, 3
        %s944 = smul.addr %s943, 8
        %s945 = scalar_lea.vmem %s0, %s944
        %p946 = pneg %p86
        %p947 = pneg %p83
        %s948 = sand.u32 %s99, 1
        %s949 = scalar_lea.sflag [#allocation4], %s948
        %s950 = sand.u32 %s99, 1
        %s951 = scalar_lea.vmem [#allocation3], %s950
        %p952 = pneg %p112
        %p953 = pneg %p109
        %p954 = pneg %p133
        %p955 = pneg %p130
        %p956 = pneg %p154
        %p957 = pneg %p151
        %p958 = scmp.lt.s32.totalorder %s58, 1
        %s959 = scalar_select %p958, %s58, 1
        %s960 = smul.addr %s959, 4
        %s961 = smul.addr %s960, 4
        %s962 = scalar_lea.vmem %s4, %s961
        %p963 = pneg %p180
        %p964 = pneg %p177
        %s965 = sand.u32 %s53, 1
        %s966 = scalar_lea.sflag [#allocation10], %s965
        %s967 = sand.u32 %s193, 1
        %s968 = scalar_lea.vmem [#allocation9], %s967
        %p969 = pneg %p206
        %p970 = pneg %p203
        %p971 = scmp.lt.s32.totalorder %s58, 1
        %s972 = scalar_select %p971, %s58, 1
        %s973 = smul.addr %s972, 4
        %s974 = smul.addr %s973, 4
        %s975 = scalar_lea.vmem %s6, %s974
        %p976 = pneg %p232
        %p977 = pneg %p229
        %s978 = sand.u32 %s53, 1
        %s979 = scalar_lea.sflag [#allocation10], %s978
        %s980 = sand.u32 %s245, 1
        %s981 = scalar_lea.vmem [#allocation11], %s980
        %p982 = pneg %p258
        %p983 = pneg %p255
        %s984 = sand.u32 %s53, 1
        %s985 = scalar_lea.sflag [#allocation13], %s984
        %s986 = sand.u32 %s271, 1
        %s987 = scalar_lea.vmem [#allocation12], %s986
        %p988 = pneg %p284
        %p989 = pneg %p281
        %s990 = sand.u32 %s53, 1
        %s991 = scalar_lea.sflag [#allocation13], %s990
        %s992 = sand.u32 %s297, 1
        %s993 = scalar_lea.vmem [#allocation14], %s992
        %p994 = pneg %p310
        %p995 = pneg %p307
        %s996 = sand.u32 %s53, 1
        %s997 = scalar_lea.sflag [#allocation16], %s996
        %s998 = sand.u32 %s323, 1
        %s999 = smul.addr %s998, 16
        %s1000 = scalar_lea.vmem [#allocation15], %s999
        %p1001 = pneg %p336
        %p1002 = pneg %p333
        %s1003 = sand.u32 %s53, 1
        %s1004 = scalar_lea.sflag [#allocation16], %s1003
        %s1005 = sand.u32 %s349, 1
        %s1006 = scalar_lea.vmem [#allocation17], %s1005
        %p1007 = pneg %p362
        %p1008 = pneg %p359
        %p1009 = scmp.lt.s32.totalorder %s58, 1
        %s1010 = scalar_select %p1009, %s58, 1
        %s1011 = smul.addr %s1010, 8
        %s1012 = smul.addr %s1011, 4
        %s1013 = scalar_lea.vmem %s12, %s1012
        %p1014 = pneg %p388
        %p1015 = pneg %p385
        %s1016 = sand.u32 %s53, 1
        %s1017 = scalar_lea.sflag [#allocation19], %s1016
        %s1018 = sand.u32 %s401, 1
        %s1019 = scalar_lea.vmem [#allocation18], %s1018
        %p1020 = pneg %p414
        %p1021 = pneg %p411
        %s1022 = sand.u32 %s53, 1
        %s1023 = scalar_lea.sflag [#allocation19], %s1022
        %s1024 = sand.u32 %s427, 1
        %s1025 = scalar_lea.vmem [#allocation20], %s1024
        %p1026 = pneg %p440
        %p1027 = pneg %p437
        %s1028 = sand.u32 %s53, 1
        %s1029 = scalar_lea.sflag [#allocation22], %s1028
        %s1030 = sand.u32 %s453, 1
        %s1031 = scalar_lea.vmem [#allocation21], %s1030
        %p1032 = pneg %p466
        %p1033 = pneg %p463
        %p1034 = pneg %p487
        %p1035 = pneg %p484
        %p1036 = pneg %p508
        %p1037 = pneg %p505
        %p1038 = pneg %p529
        %p1039 = pneg %p526
        %p1040 = pneg %p550
        %p1041 = pneg %p547
        %p1042 = pneg %p576
        %p1043 = pneg %p573
        %s1044 = sand.u32 %s563, 1
        %s1045 = scalar_lea.sflag [#allocation5], %s1044
        %s1046 = sand.u32 %s563, 1
        %s1047 = scalar_lea.vmem [#allocation24], %s1046
        %p1048 = scmp.lt.s32.totalorder %s57, 3
        %s1049 = scalar_select %p1048, %s57, 3
        %s1050 = smul.addr %s1049, 8
        %s1051 = scalar_lea.vmem %s0, %s1050
        %p1052 = scmp.lt.s32.totalorder %s58, 1
        %s1053 = scalar_select %p1052, %s58, 1
        %s1054 = smul.addr %s1053, 4
        %s1055 = smul.addr %s1054, 4
        %s1056 = scalar_lea.vmem %s4, %s1055
        %p1057 = scmp.lt.s32.totalorder %s58, 1
        %s1058 = scalar_select %p1057, %s58, 1
        %s1059 = smul.addr %s1058, 4
        %s1060 = smul.addr %s1059, 4
        %s1061 = scalar_lea.vmem %s6, %s1060
        %p1062 = scmp.lt.s32.totalorder %s58, 1
        %s1063 = scalar_select %p1062, %s58, 1
        %s1064 = smul.addr %s1063, 8
        %s1065 = smul.addr %s1064, 4
        %s1066 = scalar_lea.vmem %s12, %s1065
        %p1068 = scmp.eq.s32.totalorder %s58, 0
        // Predicated region
        $region153: #{tpu_custom_call.1} parent=99 // pred_check
          %p1069 = pneg %p1068
        $region154: #{tpu_custom_call.1} parent=99 // pred_check_branch
          %1071 = sbr.rel (%p1069) target = $region156
        $region155: #{tpu_custom_call.1} parent=99 // pred_region
          %v1072 = vld [vmem:[%s1051] sm:$0xff]
          %v1073 = vld [vmem:[#allocation6] sm:$0x1]
          %v1074 = vld [vmem:[#allocation8] sm:$0x1]
          %vm1075 = vcmask 261120
          %v1076 = vsel %vm1075, %v1072, 0.0
          %1077 = vadd.xlane.f32.xlu0 %v1076
          %v1078 = vpop.xlane.xlu0 %1077
          %v1079 = vrcp.pop 32.0
          %v1080 = vmul.f32 %v1078, %v1079
          %v1081 = vsub.f32 %v1072, %v1080
          %v1082 = vmul.f32 %v1081, %v1081
          %v1083 = vsel %vm1075, %v1082, 0.0
          %1084 = vadd.xlane.f32.xlu0 %v1083
          %v1085 = vpop.xlane.xlu0 %1084
          %v1086 = vmul.f32 %v1085, %v1079
          %v1087 = vadd.f32 %v1086, 1e-12
          %v1088 = vrsqrt.pop %v1087
          %v1089 = vmul.f32 %v1081, %v1088
          %v1091 = vlaneseq
          %v1092 = vshrl.u32 %v1091, 7
          %v1093 = vsub.s32 0, %v1092
          %v1094 = vrot.slane %v1073, %v1093
          %v1096 = vmul.f32 %v1089, %v1094
          %v1098 = vlaneseq
          %v1099 = vshrl.u32 %v1098, 7
          %v1100 = vsub.s32 0, %v1099
          %v1101 = vrot.slane %v1074, %v1100
          %v1103 = vadd.f32 %v1096, %v1101
          %1104 = vst.msk [vmem:[#allocation2] sm:$0xff] %vm1075, %v1103
        $region156: #{tpu_custom_call.1} parent=99 // pred_fallthru
          _
        %v1105 = vld [vmem:[#allocation2] sm:$0xff]
        %v1106 = vld [vmem:[%s852] sm:$0x1]
        %v1107 = vld [vmem:[%s1056] sm:$0xf]
        %v1108 = vld [vmem:[%s1056 + $0x4] sm:$0xf]
        %v1109 = vld [vmem:[%s1056 + $0x8] sm:$0xf]
        %v1110 = vld [vmem:[%s1056 + $0xc] sm:$0xf]
        %v1111 = vpack.c.bf16 %v1105, %v1105
        %v1112 = vld [vmem:[%s868] sm:$0x1]
        %v1114 = vlaneseq
        %v1115 = vshrl.u32 %v1114, 7
        %v1116 = vsub.s32 0, %v1115
        %v1117 = vrot.slane %v1112, %v1116
        %v1123 = vunpack.c.l.b16 %v1107
        %v1124 = vunpack.c.l.b16 %v1108
        %v1125 = vunpack.c.l.b16 %v1109
        %v1126 = vunpack.c.l.b16 %v1110
        %v1127 = vpack.c.b16 %v1124, %v1123
        %v1128 = vpack.c.b16 %v1126, %v1125
        %vm1131 = vcmask 261120
        %v1133 = vsel %vm1131, %v1111, 0
        %1135 = vmatprep.subr.bf16.mxu0 0
        %1136 = vmatpush1.bf16.msra.mxu0 0
        %1137 = vmatprep.subr.bf16.mxu0 0
        %1138 = vmatpush1.bf16.msra.mxu0 0
        %1139 = vmatprep.subr.bf16.mxu0 0
        %1140 = vmatpush1.bf16.msra.mxu0 0
        %1141 = vmatprep.subr.bf16.mxu0 0
        %1142 = vmatpush1.bf16.msra.mxu0 0
        %1143 = vmatprep.subr.bf16.mxu0 0
        %1144 = vmatpush1.bf16.msra.mxu0 0
        %1145 = vmatprep.subr.bf16.mxu0 0
        %1146 = vmatpush1.bf16.msra.mxu0 0
        %1147 = vmatprep.subr.bf16.mxu0 0
        %1148 = vmatpush1.bf16.msra.mxu0 %v1128
        %1149 = vmatprep.subr.bf16.mxu0 0
        %1150 = vmatpush1.bf16.msra.mxu0 %v1127
        %1151 = vmatprep.subr.bf16.mxu0 0
        %1152 = vmatpush2.bf16.msra.mxu0 0
        %1153 = vmatprep.subr.bf16.mxu0 0
        %1154 = vmatpush2.bf16.msra.mxu0 0
        %1155 = vmatprep.subr.bf16.mxu0 0
        %1156 = vmatpush2.bf16.msra.mxu0 0
        %1157 = vmatprep.subr.bf16.mxu0 0
        %1158 = vmatpush2.bf16.msra.mxu0 0
        %1159 = vmatprep.subr.bf16.mxu0 0
        %1160 = vmatpush2.bf16.msra.mxu0 0
        %1161 = vmatprep.subr.bf16.mxu0 0
        %1162 = vmatpush2.bf16.msra.mxu0 0
        %1163 = vmatprep.subr.bf16.mxu0 0
        %1164 = vmatpush2.bf16.msra.mxu0 0
        %1165 = vmatprep.subr.bf16.mxu0 0
        %1166 = vmatpush2.bf16.msra.mxu0 0
        %1167 = vmatprep.mubr.bf16.mxu0 0
        %1168 = vmatmul.mubr.bf16.gmra.mxu0 %v1133
        %v1169 = vpop.f32.mrf.mxu0
        %v1170 = vadd.f32 %v1117, %v1169
        %v1171 = vpop.f32.mrf.mxu0
        %v1172 = vpop.f32.mrf.mxu0
        %v1173 = vpop.f32.mrf.mxu0
        %1174 = vdwg.mxu0
        %v1175 = vld [vmem:[%s1061] sm:$0xf]
        %v1176 = vld [vmem:[%s1061 + $0x4] sm:$0xf]
        %v1177 = vld [vmem:[%s1061 + $0x8] sm:$0xf]
        %v1178 = vld [vmem:[%s1061 + $0xc] sm:$0xf]
        %v1179 = vpack.c.bf16 %v1170, %v1170
        %1181 = vrot.lane.b32.xlu0 %v1179, 96
        %v1182 = vpop.permute.xlu0 %1181
        %vm1183 = vcmask 130048
        %v1185 = vsel %vm1183, %v1179, 0
        %v1188 = vsel %vm1183, %v1182, 0
        %1190 = vmatprep.subr.bf16.mxu0 0
        %1191 = vmatpush1.bf16.xpose.msra.mxu0 0
        %1192 = vmatprep.subr.bf16.mxu0 0
        %1193 = vmatpush1.bf16.xpose.msra.mxu0 0
        %1194 = vmatprep.subr.bf16.mxu0 0
        %1195 = vmatpush1.bf16.xpose.msra.mxu0 0
        %1196 = vmatprep.subr.bf16.mxu0 0
        %1197 = vmatpush1.bf16.xpose.msra.mxu0 0
        %1198 = vmatprep.subr.bf16.mxu0 0
        %1199 = vmatpush1.bf16.xpose.msra.mxu0 0
        %1200 = vmatprep.subr.bf16.mxu0 0
        %1201 = vmatpush1.bf16.xpose.msra.mxu0 0
        %1202 = vmatprep.subr.bf16.mxu0 0
        %1203 = vmatpush1.bf16.xpose.msra.mxu0 0
        %1204 = vmatprep.subr.bf16.mxu0 0
        %1205 = vmatpush1.bf16.xpose.msra.mxu0 %v1188
        %1206 = vmatprep.subr.bf16.mxu0 0
        %1207 = vmatpush2.bf16.xpose.msra.mxu0 0
        %1208 = vmatprep.subr.bf16.mxu0 0
        %1209 = vmatpush2.bf16.xpose.msra.mxu0 0
        %1210 = vmatprep.subr.bf16.mxu0 0
        %1211 = vmatpush2.bf16.xpose.msra.mxu0 0
        %1212 = vmatprep.subr.bf16.mxu0 0
        %1213 = vmatpush2.bf16.xpose.msra.mxu0 0
        %1214 = vmatprep.subr.bf16.mxu0 0
        %1215 = vmatpush2.bf16.xpose.msra.mxu0 0
        %1216 = vmatprep.subr.bf16.mxu0 0
        %1217 = vmatpush2.bf16.xpose.msra.mxu0 0
        %1218 = vmatprep.subr.bf16.mxu0 0
        %1219 = vmatpush2.bf16.xpose.msra.mxu0 0
        %1220 = vmatprep.subr.bf16.mxu0 0
        %1221 = vmatpush2.bf16.xpose.msra.mxu0 0
        %1222 = vmatprep.mubr.bf16.mxu0 0
        %1223 = vmatmul.mubr.bf16.gmra.mxu0 %v1185
        %v1224 = vpop.f32.mrf.mxu0
        %v1225 = vadd.f32 0.0, %v1224
        %v1226 = vpop.f32.mrf.mxu0
        %v1227 = vpop.f32.mrf.mxu0
        %v1228 = vpop.f32.mrf.mxu0
        %1229 = vdwg.mxu0
        %v1230 = vmul.f32 %v1225, 0.25
        %v1232 = vlaneseq
        %v1233 = vshrl.u32 %v1232, 7
        %v1234 = vsub.s32 0, %v1233
        %v1235 = vrot.slane %v1106, %v1234
        %v1237 = vadd.f32 %v1230, %v1235
        %vm1238 = vcmask 64512
        %v1239 = vsel %vm1238, %v1237, -inf
        %1240 = vmax.xlane.f32.xlu0 %v1239
        %v1241 = vpop.xlane.xlu0 %1240
        %v1242 = vsub.f32 %v1237, %v1241
        %v1243 = vmul.f32 %v1242, 1.442695
        %v1244 = vpow.pop %v1243
        %v1245 = vsel %vm1238, %v1244, 0.0
        %1246 = vadd.xlane.f32.xlu0 %v1245
        %v1247 = vpop.xlane.xlu0 %1246
        %v1248 = vrcp.pop %v1247
        %v1249 = vmul.f32 %v1244, %v1248
        %v1250 = vpack.c.bf16 %v1249, %v1249
        %1251 = vrot.lane.b32.xlu0 %v1179, 64
        %v1252 = vpop.permute.xlu0 %1251
        %v1254 = vsel %vm1238, %v1250, 0
        %vm1256 = vcmask 1043456
        %v1258 = vsel %vm1256, %v1252, 0
        %1260 = vmatprep.subr.bf16.mxu0 0
        %1261 = vmatpush1.bf16.msra.mxu0 0
        %1262 = vmatprep.subr.bf16.mxu0 0
        %1263 = vmatpush1.bf16.msra.mxu0 0
        %1264 = vmatprep.subr.bf16.mxu0 0
        %1265 = vmatpush1.bf16.msra.mxu0 0
        %1266 = vmatprep.subr.bf16.mxu0 0
        %1267 = vmatpush1.bf16.msra.mxu0 0
        %1268 = vmatprep.subr.bf16.mxu0 0
        %1269 = vmatpush1.bf16.msra.mxu0 0
        %1270 = vmatprep.subr.bf16.mxu0 0
        %1271 = vmatpush1.bf16.msra.mxu0 0
        %1272 = vmatprep.subr.bf16.mxu0 0
        %1273 = vmatpush1.bf16.msra.mxu0 0
        %1274 = vmatprep.subr.bf16.mxu0 0
        %1275 = vmatpush1.bf16.msra.mxu0 %v1258
        %1276 = vmatprep.subr.bf16.mxu0 0
        %1277 = vmatpush2.bf16.msra.mxu0 0
        %1278 = vmatprep.subr.bf16.mxu0 0
        %1279 = vmatpush2.bf16.msra.mxu0 0
        %1280 = vmatprep.subr.bf16.mxu0 0
        %1281 = vmatpush2.bf16.msra.mxu0 0
        %1282 = vmatprep.subr.bf16.mxu0 0
        %1283 = vmatpush2.bf16.msra.mxu0 0
        %1284 = vmatprep.subr.bf16.mxu0 0
        %1285 = vmatpush2.bf16.msra.mxu0 0
        %1286 = vmatprep.subr.bf16.mxu0 0
        %1287 = vmatpush2.bf16.msra.mxu0 0
        %1288 = vmatprep.subr.bf16.mxu0 0
        %1289 = vmatpush2.bf16.msra.mxu0 0
        %1290 = vmatprep.subr.bf16.mxu0 0
        %1291 = vmatpush2.bf16.msra.mxu0 0
        %1292 = vmatprep.mubr.bf16.mxu0 0
        %1293 = vmatmul.mubr.bf16.gmra.mxu0 %v1254
        %v1294 = vpop.f32.mrf.mxu0
        %v1295 = vadd.f32 0.0, %v1294
        %v1296 = vpop.f32.mrf.mxu0
        %v1297 = vpop.f32.mrf.mxu0
        %v1298 = vpop.f32.mrf.mxu0
        %1299 = vdwg.mxu0
        %v1300 = vpack.c.bf16 %v1295, %v1295
        %1301 = vrot.lane.b32.xlu0 %v1179, 112
        %v1302 = vpop.permute.xlu0 %1301
        %1303 = vrot.lane.b32.xlu0 %v1179, 80
        %v1304 = vpop.permute.xlu0 %1303
        %v1306 = vsel %vm1183, %v1302, 0
        %v1309 = vsel %vm1183, %v1304, 0
        %1311 = vmatprep.subr.bf16.mxu0 0
        %1312 = vmatpush1.bf16.xpose.msra.mxu0 0
        %1313 = vmatprep.subr.bf16.mxu0 0
        %1314 = vmatpush1.bf16.xpose.msra.mxu0 0
        %1315 = vmatprep.subr.bf16.mxu0 0
        %1316 = vmatpush1.bf16.xpose.msra.mxu0 0
        %1317 = vmatprep.subr.bf16.mxu0 0
        %1318 = vmatpush1.bf16.xpose.msra.mxu0 0
        %1319 = vmatprep.subr.bf16.mxu0 0
        %1320 = vmatpush1.bf16.xpose.msra.mxu0 0
        %1321 = vmatprep.subr.bf16.mxu0 0
        %1322 = vmatpush1.bf16.xpose.msra.mxu0 0
        %1323 = vmatprep.subr.bf16.mxu0 0
        %1324 = vmatpush1.bf16.xpose.msra.mxu0 0
        %1325 = vmatprep.subr.bf16.mxu0 0
        %1326 = vmatpush1.bf16.xpose.msra.mxu0 %v1309
        %1327 = vmatprep.subr.bf16.mxu0 0
        %1328 = vmatpush2.bf16.xpose.msra.mxu0 0
        %1329 = vmatprep.subr.bf16.mxu0 0
        %1330 = vmatpush2.bf16.xpose.msra.mxu0 0
        %1331 = vmatprep.subr.bf16.mxu0 0
        %1332 = vmatpush2.bf16.xpose.msra.mxu0 0
        %1333 = vmatprep.subr.bf16.mxu0 0
        %1334 = vmatpush2.bf16.xpose.msra.mxu0 0
        %1335 = vmatprep.subr.bf16.mxu0 0
        %1336 = vmatpush2.bf16.xpose.msra.mxu0 0
        %1337 = vmatprep.subr.bf16.mxu0 0
        %1338 = vmatpush2.bf16.xpose.msra.mxu0 0
        %1339 = vmatprep.subr.bf16.mxu0 0
        %1340 = vmatpush2.bf16.xpose.msra.mxu0 0
        %1341 = vmatprep.subr.bf16.mxu0 0
        %1342 = vmatpush2.bf16.xpose.msra.mxu0 0
        %1343 = vmatprep.mubr.bf16.mxu0 0
        %1344 = vmatmul.mubr.bf16.gmra.mxu0 %v1306
        %v1345 = vpop.f32.mrf.mxu0
        %v1346 = vadd.f32 0.0, %v1345
        %v1347 = vpop.f32.mrf.mxu0
        %v1348 = vpop.f32.mrf.mxu0
        %v1349 = vpop.f32.mrf.mxu0
        %1350 = vdwg.mxu0
        %v1351 = vmul.f32 %v1346, 0.25
        %v1352 = vadd.f32 %v1351, %v1235
        %v1353 = vsel %vm1238, %v1352, -inf
        %1354 = vmax.xlane.f32.xlu0 %v1353
        %v1355 = vpop.xlane.xlu0 %1354
        %v1356 = vsub.f32 %v1352, %v1355
        %v1357 = vmul.f32 %v1356, 1.442695
        %v1358 = vpow.pop %v1357
        %v1359 = vsel %vm1238, %v1358, 0.0
        %1360 = vadd.xlane.f32.xlu0 %v1359
        %v1361 = vpop.xlane.xlu0 %1360
        %v1362 = vrcp.pop %v1361
        %v1363 = vmul.f32 %v1358, %v1362
        %v1364 = vpack.c.bf16 %v1363, %v1363
        %1365 = vrot.lane.b32.xlu0 %v1179, 48
        %v1366 = vpop.permute.xlu0 %1365
        %v1368 = vsel %vm1238, %v1364, 0
        %v1371 = vsel %vm1256, %v1366, 0
        %1373 = vmatprep.subr.bf16.mxu0 0
        %1374 = vmatpush1.bf16.msra.mxu0 0
        %1375 = vmatprep.subr.bf16.mxu0 0
        %1376 = vmatpush1.bf16.msra.mxu0 0
        %1377 = vmatprep.subr.bf16.mxu0 0
        %1378 = vmatpush1.bf16.msra.mxu0 0
        %1379 = vmatprep.subr.bf16.mxu0 0
        %1380 = vmatpush1.bf16.msra.mxu0 0
        %1381 = vmatprep.subr.bf16.mxu0 0
        %1382 = vmatpush1.bf16.msra.mxu0 0
        %1383 = vmatprep.subr.bf16.mxu0 0
        %1384 = vmatpush1.bf16.msra.mxu0 0
        %1385 = vmatprep.subr.bf16.mxu0 0
        %1386 = vmatpush1.bf16.msra.mxu0 0
        %1387 = vmatprep.subr.bf16.mxu0 0
        %1388 = vmatpush1.bf16.msra.mxu0 %v1371
        %1389 = vmatprep.subr.bf16.mxu0 0
        %1390 = vmatpush2.bf16.msra.mxu0 0
        %1391 = vmatprep.subr.bf16.mxu0 0
        %1392 = vmatpush2.bf16.msra.mxu0 0
        %1393 = vmatprep.subr.bf16.mxu0 0
        %1394 = vmatpush2.bf16.msra.mxu0 0
        %1395 = vmatprep.subr.bf16.mxu0 0
        %1396 = vmatpush2.bf16.msra.mxu0 0
        %1397 = vmatprep.subr.bf16.mxu0 0
        %1398 = vmatpush2.bf16.msra.mxu0 0
        %1399 = vmatprep.subr.bf16.mxu0 0
        %1400 = vmatpush2.bf16.msra.mxu0 0
        %1401 = vmatprep.subr.bf16.mxu0 0
        %1402 = vmatpush2.bf16.msra.mxu0 0
        %1403 = vmatprep.subr.bf16.mxu0 0
        %1404 = vmatpush2.bf16.msra.mxu0 0
        %1405 = vmatprep.mubr.bf16.mxu0 0
        %1406 = vmatmul.mubr.bf16.gmra.mxu0 %v1368
        %v1407 = vpop.f32.mrf.mxu0
        %v1408 = vadd.f32 0.0, %v1407
        %v1409 = vpop.f32.mrf.mxu0
        %v1410 = vpop.f32.mrf.mxu0
        %v1411 = vpop.f32.mrf.mxu0
        %1412 = vdwg.mxu0
        %v1413 = vpack.c.bf16 %v1408, %v1408
        %v1416 = vunpack.c.l.b16 %v1177
        %v1417 = vunpack.c.l.b16 %v1178
        %v1418 = vpack.c.b16 %v1417, %v1416
        %v1421 = vsel %vm1183, %v1413, 0
        %1423 = vmatprep.subr.bf16.mxu0 0
        %1424 = vmatpush1.bf16.msra.mxu0 0
        %1425 = vmatprep.subr.bf16.mxu0 0
        %1426 = vmatpush1.bf16.msra.mxu0 0
        %1427 = vmatprep.subr.bf16.mxu0 0
        %1428 = vmatpush1.bf16.msra.mxu0 0
        %1429 = vmatprep.subr.bf16.mxu0 0
        %1430 = vmatpush1.bf16.msra.mxu0 0
        %1431 = vmatprep.subr.bf16.mxu0 0
        %1432 = vmatpush1.bf16.msra.mxu0 0
        %1433 = vmatprep.subr.bf16.mxu0 0
        %1434 = vmatpush1.bf16.msra.mxu0 0
        %1435 = vmatprep.subr.bf16.mxu0 0
        %1436 = vmatpush1.bf16.msra.mxu0 0
        %1437 = vmatprep.subr.bf16.mxu0 0
        %1438 = vmatpush1.bf16.msra.mxu0 %v1418
        %1439 = vmatprep.subr.bf16.mxu0 0
        %1440 = vmatpush2.bf16.msra.mxu0 0
        %1441 = vmatprep.subr.bf16.mxu0 0
        %1442 = vmatpush2.bf16.msra.mxu0 0
        %1443 = vmatprep.subr.bf16.mxu0 0
        %1444 = vmatpush2.bf16.msra.mxu0 0
        %1445 = vmatprep.subr.bf16.mxu0 0
        %1446 = vmatpush2.bf16.msra.mxu0 0
        %1447 = vmatprep.subr.bf16.mxu0 0
        %1448 = vmatpush2.bf16.msra.mxu0 0
        %1449 = vmatprep.subr.bf16.mxu0 0
        %1450 = vmatpush2.bf16.msra.mxu0 0
        %1451 = vmatprep.subr.bf16.mxu0 0
        %1452 = vmatpush2.bf16.msra.mxu0 0
        %1453 = vmatprep.subr.bf16.mxu0 0
        %1454 = vmatpush2.bf16.msra.mxu0 0
        %1455 = vmatprep.mubr.bf16.mxu0 0
        %1456 = vmatmul.mubr.bf16.gmra.mxu0 %v1421
        %v1457 = vpop.f32.mrf.mxu0
        %v1458 = vadd.f32 0.0, %v1457
        %v1459 = vpop.f32.mrf.mxu0
        %v1460 = vpop.f32.mrf.mxu0
        %v1461 = vpop.f32.mrf.mxu0
        %1462 = vdwg.mxu0
        %v1465 = vunpack.c.l.b16 %v1175
        %v1466 = vunpack.c.l.b16 %v1176
        %v1467 = vpack.c.b16 %v1466, %v1465
        %v1470 = vsel %vm1183, %v1300, 0
        %1472 = vmatprep.subr.bf16.mxu0 0
        %1473 = vmatpush1.bf16.msra.mxu0 0
        %1474 = vmatprep.subr.bf16.mxu0 0
        %1475 = vmatpush1.bf16.msra.mxu0 0
        %1476 = vmatprep.subr.bf16.mxu0 0
        %1477 = vmatpush1.bf16.msra.mxu0 0
        %1478 = vmatprep.subr.bf16.mxu0 0
        %1479 = vmatpush1.bf16.msra.mxu0 0
        %1480 = vmatprep.subr.bf16.mxu0 0
        %1481 = vmatpush1.bf16.msra.mxu0 0
        %1482 = vmatprep.subr.bf16.mxu0 0
        %1483 = vmatpush1.bf16.msra.mxu0 0
        %1484 = vmatprep.subr.bf16.mxu0 0
        %1485 = vmatpush1.bf16.msra.mxu0 0
        %1486 = vmatprep.subr.bf16.mxu0 0
        %1487 = vmatpush1.bf16.msra.mxu0 %v1467
        %1488 = vmatprep.subr.bf16.mxu0 0
        %1489 = vmatpush2.bf16.msra.mxu0 0
        %1490 = vmatprep.subr.bf16.mxu0 0
        %1491 = vmatpush2.bf16.msra.mxu0 0
        %1492 = vmatprep.subr.bf16.mxu0 0
        %1493 = vmatpush2.bf16.msra.mxu0 0
        %1494 = vmatprep.subr.bf16.mxu0 0
        %1495 = vmatpush2.bf16.msra.mxu0 0
        %1496 = vmatprep.subr.bf16.mxu0 0
        %1497 = vmatpush2.bf16.msra.mxu0 0
        %1498 = vmatprep.subr.bf16.mxu0 0
        %1499 = vmatpush2.bf16.msra.mxu0 0
        %1500 = vmatprep.subr.bf16.mxu0 0
        %1501 = vmatpush2.bf16.msra.mxu0 0
        %1502 = vmatprep.subr.bf16.mxu0 0
        %1503 = vmatpush2.bf16.msra.mxu0 0
        %1504 = vmatprep.mubr.bf16.mxu0 0
        %1505 = vmatmul.mubr.bf16.gmra.mxu0 %v1470
        %v1506 = vpop.f32.mrf.mxu0
        %v1507 = vadd.f32 %v1458, %v1506
        %v1508 = vpop.f32.mrf.mxu0
        %v1509 = vpop.f32.mrf.mxu0
        %v1510 = vpop.f32.mrf.mxu0
        %1511 = vdwg.mxu0
        %v1512 = vld [vmem:[%s876] sm:$0x1]
        %v1514 = vlaneseq
        %v1515 = vshrl.u32 %v1514, 7
        %v1516 = vsub.s32 0, %v1515
        %v1517 = vrot.slane %v1512, %v1516
        %v1519 = vadd.f32 %v1507, %v1517
        %v1520 = vadd.f32 %v1519, %v1105
        %v1521 = vld [vmem:[%s884] sm:$0x1]
        %v1522 = vld [vmem:[%s892] sm:$0x1]
        %v1523 = vsel %vm1131, %v1520, 0.0
        %1524 = vadd.xlane.f32.xlu0 %v1523
        %v1525 = vpop.xlane.xlu0 %1524
        %v1526 = vrcp.pop 32.0
        %v1527 = vmul.f32 %v1525, %v1526
        %v1528 = vsub.f32 %v1520, %v1527
        %v1529 = vmul.f32 %v1528, %v1528
        %v1530 = vsel %vm1131, %v1529, 0.0
        %1531 = vadd.xlane.f32.xlu0 %v1530
        %v1532 = vpop.xlane.xlu0 %1531
        %v1533 = vmul.f32 %v1532, %v1526
        %v1534 = vadd.f32 %v1533, 1e-12
        %v1535 = vrsqrt.pop %v1534
        %v1536 = vmul.f32 %v1528, %v1535
        %v1538 = vlaneseq
        %v1539 = vshrl.u32 %v1538, 7
        %v1540 = vsub.s32 0, %v1539
        %v1541 = vrot.slane %v1521, %v1540
        %v1543 = vmul.f32 %v1536, %v1541
        %v1545 = vlaneseq
        %v1546 = vshrl.u32 %v1545, 7
        %v1547 = vsub.s32 0, %v1546
        %v1548 = vrot.slane %v1522, %v1547
        %v1550 = vadd.f32 %v1543, %v1548
        %v1551 = vld [vmem:[%s901] sm:$0xf]
        %v1552 = vld [vmem:[%s901 + $0x4] sm:$0xf]
        %v1553 = vld [vmem:[%s901 + $0x8] sm:$0xf]
        %v1554 = vld [vmem:[%s901 + $0xc] sm:$0xf]
        %v1555 = vpack.c.bf16 %v1550, %v1550
        %v1556 = vld [vmem:[%s909] sm:$0x1]
        %v1558 = vlaneseq
        %v1559 = vshrl.u32 %v1558, 7
        %v1560 = vsub.s32 0, %v1559
        %v1561 = vrot.slane %v1556, %v1560
        %v1567 = vunpack.c.l.b16 %v1551
        %v1568 = vunpack.c.l.b16 %v1552
        %v1569 = vunpack.c.l.b16 %v1553
        %v1570 = vunpack.c.l.b16 %v1554
        %v1571 = vpack.c.b16 %v1568, %v1567
        %v1572 = vpack.c.b16 %v1570, %v1569
        %v1576 = vsel %vm1131, %v1555, 0
        %1578 = vmatprep.subr.bf16.mxu0 0
        %1579 = vmatpush1.bf16.msra.mxu0 0
        %1580 = vmatprep.subr.bf16.mxu0 0
        %1581 = vmatpush1.bf16.msra.mxu0 0
        %1582 = vmatprep.subr.bf16.mxu0 0
        %1583 = vmatpush1.bf16.msra.mxu0 0
        %1584 = vmatprep.subr.bf16.mxu0 0
        %1585 = vmatpush1.bf16.msra.mxu0 0
        %1586 = vmatprep.subr.bf16.mxu0 0
        %1587 = vmatpush1.bf16.msra.mxu0 0
        %1588 = vmatprep.subr.bf16.mxu0 0
        %1589 = vmatpush1.bf16.msra.mxu0 0
        %1590 = vmatprep.subr.bf16.mxu0 0
        %1591 = vmatpush1.bf16.msra.mxu0 %v1572
        %1592 = vmatprep.subr.bf16.mxu0 0
        %1593 = vmatpush1.bf16.msra.mxu0 %v1571
        %1594 = vmatprep.subr.bf16.mxu0 0
        %1595 = vmatpush2.bf16.msra.mxu0 0
        %1596 = vmatprep.subr.bf16.mxu0 0
        %1597 = vmatpush2.bf16.msra.mxu0 0
        %1598 = vmatprep.subr.bf16.mxu0 0
        %1599 = vmatpush2.bf16.msra.mxu0 0
        %1600 = vmatprep.subr.bf16.mxu0 0
        %1601 = vmatpush2.bf16.msra.mxu0 0
        %1602 = vmatprep.subr.bf16.mxu0 0
        %1603 = vmatpush2.bf16.msra.mxu0 0
        %1604 = vmatprep.subr.bf16.mxu0 0
        %1605 = vmatpush2.bf16.msra.mxu0 0
        %1606 = vmatprep.subr.bf16.mxu0 0
        %1607 = vmatpush2.bf16.msra.mxu0 0
        %1608 = vmatprep.subr.bf16.mxu0 0
        %1609 = vmatpush2.bf16.msra.mxu0 0
        %1610 = vmatprep.mubr.bf16.mxu0 0
        %1611 = vmatmul.mubr.bf16.gmra.mxu0 %v1576
        %v1612 = vpop.f32.mrf.mxu0
        %v1613 = vadd.f32 %v1561, %v1612
        %v1614 = vpop.f32.mrf.mxu0
        %v1615 = vpop.f32.mrf.mxu0
        %v1616 = vpop.f32.mrf.mxu0
        %1617 = vdwg.mxu0
        %v1618 = vmul.f32 %v1613, 0.5
        %v1619 = vmul.f32 %v1613, 0.044715
        %v1620 = vmul.f32 %v1619, %v1613
        %v1621 = vmul.f32 %v1620, %v1613
        %v1622 = vadd.f32 %v1613, %v1621
        %v1623 = vmul.f32 %v1622, 0.7978846
        %v1624 = vtanh.pop %v1623
        %v1625 = vadd.f32 %v1624, 1.0
        %v1626 = vmul.f32 %v1618, %v1625
        %v1627 = vld [vmem:[%s1066] sm:$0xf]
        %v1628 = vld [vmem:[%s1066 + $0x4] sm:$0xf]
        %v1629 = vld [vmem:[%s1066 + $0x8] sm:$0xf]
        %v1630 = vld [vmem:[%s1066 + $0xc] sm:$0xf]
        %v1631 = vld [vmem:[%s1066 + $0x10] sm:$0xf]
        %v1632 = vld [vmem:[%s1066 + $0x14] sm:$0xf]
        %v1633 = vld [vmem:[%s1066 + $0x18] sm:$0xf]
        %v1634 = vld [vmem:[%s1066 + $0x1c] sm:$0xf]
        %v1635 = vpack.c.bf16 %v1626, %v1626
        %v1636 = vld [vmem:[%s917] sm:$0x1]
        %v1638 = vlaneseq
        %v1639 = vshrl.u32 %v1638, 7
        %v1640 = vsub.s32 0, %v1639
        %v1641 = vrot.slane %v1636, %v1640
        %v1651 = vunpack.c.l.b16 %v1627
        %v1652 = vunpack.c.l.b16 %v1628
        %v1653 = vunpack.c.l.b16 %v1629
        %v1654 = vunpack.c.l.b16 %v1630
        %v1655 = vunpack.c.l.b16 %v1631
        %v1656 = vunpack.c.l.b16 %v1632
        %v1657 = vunpack.c.l.b16 %v1633
        %v1658 = vunpack.c.l.b16 %v1634
        %v1659 = vpack.c.b16 %v1652, %v1651
        %v1660 = vpack.c.b16 %v1654, %v1653
        %v1661 = vpack.c.b16 %v1656, %v1655
        %v1662 = vpack.c.b16 %v1658, %v1657
        %vm1667 = vcmask 523264
        %v1669 = vsel %vm1667, %v1635, 0
        %1671 = vmatprep.subr.bf16.mxu0 0
        %1672 = vmatpush1.bf16.msra.mxu0 0
        %1673 = vmatprep.subr.bf16.mxu0 0
        %1674 = vmatpush1.bf16.msra.mxu0 0
        %1675 = vmatprep.subr.bf16.mxu0 0
        %1676 = vmatpush1.bf16.msra.mxu0 0
        %1677 = vmatprep.subr.bf16.mxu0 0
        %1678 = vmatpush1.bf16.msra.mxu0 0
        %1679 = vmatprep.subr.bf16.mxu0 0
        %1680 = vmatpush1.bf16.msra.mxu0 %v1662
        %1681 = vmatprep.subr.bf16.mxu0 0
        %1682 = vmatpush1.bf16.msra.mxu0 %v1661
        %1683 = vmatprep.subr.bf16.mxu0 0
        %1684 = vmatpush1.bf16.msra.mxu0 %v1660
        %1685 = vmatprep.subr.bf16.mxu0 0
        %1686 = vmatpush1.bf16.msra.mxu0 %v1659
        %1687 = vmatprep.subr.bf16.mxu0 0
        %1688 = vmatpush2.bf16.msra.mxu0 0
        %1689 = vmatprep.subr.bf16.mxu0 0
        %1690 = vmatpush2.bf16.msra.mxu0 0
        %1691 = vmatprep.subr.bf16.mxu0 0
        %1692 = vmatpush2.bf16.msra.mxu0 0
        %1693 = vmatprep.subr.bf16.mxu0 0
        %1694 = vmatpush2.bf16.msra.mxu0 0
        %1695 = vmatprep.subr.bf16.mxu0 0
        %1696 = vmatpush2.bf16.msra.mxu0 0
        %1697 = vmatprep.subr.bf16.mxu0 0
        %1698 = vmatpush2.bf16.msra.mxu0 0
        %1699 = vmatprep.subr.bf16.mxu0 0
        %1700 = vmatpush2.bf16.msra.mxu0 0
        %1701 = vmatprep.subr.bf16.mxu0 0
        %1702 = vmatpush2.bf16.msra.mxu0 0
        %1703 = vmatprep.mubr.bf16.mxu0 0
        %1704 = vmatmul.mubr.bf16.gmra.mxu0 %v1669
        %v1705 = vpop.f32.mrf.mxu0
        %v1706 = vadd.f32 %v1641, %v1705
        %v1707 = vpop.f32.mrf.mxu0
        %v1708 = vpop.f32.mrf.mxu0
        %v1709 = vpop.f32.mrf.mxu0
        %1710 = vdwg.mxu0
        %v1711 = vadd.f32 %v1706, %v1550
        %v1712 = vld [vmem:[%s925] sm:$0x1]
        %v1713 = vld [vmem:[%s933] sm:$0x1]
        %v1714 = vsel %vm1131, %v1711, 0.0
        %1715 = vadd.xlane.f32.xlu0 %v1714
        %v1716 = vpop.xlane.xlu0 %1715
        %v1717 = vmul.f32 %v1716, %v1526
        %v1718 = vsub.f32 %v1711, %v1717
        %v1719 = vmul.f32 %v1718, %v1718
        %v1720 = vsel %vm1131, %v1719, 0.0
        %1721 = vadd.xlane.f32.xlu0 %v1720
        %v1722 = vpop.xlane.xlu0 %1721
        %v1723 = vmul.f32 %v1722, %v1526
        %v1724 = vadd.f32 %v1723, 1e-12
        %v1725 = vrsqrt.pop %v1724
        %v1726 = vmul.f32 %v1718, %v1725
        %v1728 = vlaneseq
        %v1729 = vshrl.u32 %v1728, 7
        %v1730 = vsub.s32 0, %v1729
        %v1731 = vrot.slane %v1712, %v1730
        %v1733 = vmul.f32 %v1726, %v1731
        %v1735 = vlaneseq
        %v1736 = vshrl.u32 %v1735, 7
        %v1737 = vsub.s32 0, %v1736
        %v1738 = vrot.slane %v1713, %v1737
        %v1740 = vadd.f32 %v1733, %v1738
        %1741 = vst.msk [vmem:[#allocation2] sm:$0xff] %vm1131, %v1740
        %p1742 = scmp.eq.s32.totalorder %s58, 1
        // Predicated region
        $region157: #{tpu_custom_call.1} parent=99 // pred_check
          %p1743 = pneg %p1742
        $region158: #{tpu_custom_call.1} parent=99 // pred_check_branch
          %1745 = sbr.rel (%p1743) target = $region160
        $region159: #{tpu_custom_call.1} parent=99 // pred_region
          %v1746 = vld [vmem:[%s16] sm:$0xf]
          %v1747 = vld [vmem:[%s16 + $0x4] sm:$0xf]
          %v1748 = vld [vmem:[%s16 + $0x8] sm:$0xf]
          %v1749 = vld [vmem:[%s16 + $0xc] sm:$0xf]
          %v1750 = vpack.c.bf16 %v1740, %v1740
          %v1751 = vld [vmem:[#allocation23] sm:$0x1]
          %v1756 = vunpack.c.l.b16 %v1746
          %v1757 = vunpack.c.l.b16 %v1747
          %v1758 = vunpack.c.l.b16 %v1748
          %v1759 = vunpack.c.l.b16 %v1749
          %v1760 = vpack.c.b16 %v1757, %v1756
          %v1761 = vpack.c.b16 %v1759, %v1758
          %v1765 = vsel %vm1131, %v1750, 0
          %1767 = vmatprep.subr.bf16.mxu0 0
          %1768 = vmatpush1.bf16.msra.mxu0 0
          %1769 = vmatprep.subr.bf16.mxu0 0
          %1770 = vmatpush1.bf16.msra.mxu0 0
          %1771 = vmatprep.subr.bf16.mxu0 0
          %1772 = vmatpush1.bf16.msra.mxu0 0
          %1773 = vmatprep.subr.bf16.mxu0 0
          %1774 = vmatpush1.bf16.msra.mxu0 0
          %1775 = vmatprep.subr.bf16.mxu0 0
          %1776 = vmatpush1.bf16.msra.mxu0 0
          %1777 = vmatprep.subr.bf16.mxu0 0
          %1778 = vmatpush1.bf16.msra.mxu0 0
          %1779 = vmatprep.subr.bf16.mxu0 0
          %1780 = vmatpush1.bf16.msra.mxu0 %v1761
          %1781 = vmatprep.subr.bf16.mxu0 0
          %1782 = vmatpush1.bf16.msra.mxu0 %v1760
          %1783 = vmatprep.subr.bf16.mxu0 0
          %1784 = vmatpush2.bf16.msra.mxu0 0
          %1785 = vmatprep.subr.bf16.mxu0 0
          %1786 = vmatpush2.bf16.msra.mxu0 0
          %1787 = vmatprep.subr.bf16.mxu0 0
          %1788 = vmatpush2.bf16.msra.mxu0 0
          %1789 = vmatprep.subr.bf16.mxu0 0
          %1790 = vmatpush2.bf16.msra.mxu0 0
          %1791 = vmatprep.subr.bf16.mxu0 0
          %1792 = vmatpush2.bf16.msra.mxu0 0
          %1793 = vmatprep.subr.bf16.mxu0 0
          %1794 = vmatpush2.bf16.msra.mxu0 0
          %1795 = vmatprep.subr.bf16.mxu0 0
          %1796 = vmatpush2.bf16.msra.mxu0 0
          %1797 = vmatprep.subr.bf16.mxu0 0
          %1798 = vmatpush2.bf16.msra.mxu0 0
          %1799 = vmatprep.mubr.bf16.mxu0 0
          %1800 = vmatmul.mubr.bf16.gmra.mxu0 %v1765
          %v1801 = vpop.f32.mrf.mxu0
          %v1802 = vadd.f32 %v1751, %v1801
          %v1803 = vpop.f32.mrf.mxu0
          %v1804 = vpop.f32.mrf.mxu0
          %v1805 = vpop.f32.mrf.mxu0
          %1806 = vdwg.mxu0
          %v1807 = vtanh.pop %v1802
          %v1808 = vld [vmem:[%s18] sm:$0xf]
          %v1809 = vld [vmem:[%s18 + $0x4] sm:$0xf]
          %v1810 = vld [vmem:[%s18 + $0x8] sm:$0xf]
          %v1811 = vld [vmem:[%s18 + $0xc] sm:$0xf]
          %v1812 = vpack.c.bf16 %v1807, %v1807
          %v1813 = vld [vmem:[%s19] sm:$0x1]
          %v1818 = vunpack.c.l.b16 %v1808
          %v1819 = vunpack.c.l.b16 %v1809
          %v1820 = vunpack.c.l.b16 %v1810
          %v1821 = vunpack.c.l.b16 %v1811
          %v1822 = vpack.c.b16 %v1819, %v1818
          %v1823 = vpack.c.b16 %v1821, %v1820
          %v1827 = vsel %vm1131, %v1812, 0
          %1829 = vmatprep.subr.bf16.mxu0 0
          %1830 = vmatpush1.bf16.msra.mxu0 0
          %1831 = vmatprep.subr.bf16.mxu0 0
          %1832 = vmatpush1.bf16.msra.mxu0 0
          %1833 = vmatprep.subr.bf16.mxu0 0
          %1834 = vmatpush1.bf16.msra.mxu0 0
          %1835 = vmatprep.subr.bf16.mxu0 0
          %1836 = vmatpush1.bf16.msra.mxu0 0
          %1837 = vmatprep.subr.bf16.mxu0 0
          %1838 = vmatpush1.bf16.msra.mxu0 0
          %1839 = vmatprep.subr.bf16.mxu0 0
          %1840 = vmatpush1.bf16.msra.mxu0 0
          %1841 = vmatprep.subr.bf16.mxu0 0
          %1842 = vmatpush1.bf16.msra.mxu0 %v1823
          %1843 = vmatprep.subr.bf16.mxu0 0
          %1844 = vmatpush1.bf16.msra.mxu0 %v1822
          %1845 = vmatprep.subr.bf16.mxu0 0
          %1846 = vmatpush2.bf16.msra.mxu0 0
          %1847 = vmatprep.subr.bf16.mxu0 0
          %1848 = vmatpush2.bf16.msra.mxu0 0
          %1849 = vmatprep.subr.bf16.mxu0 0
          %1850 = vmatpush2.bf16.msra.mxu0 0
          %1851 = vmatprep.subr.bf16.mxu0 0
          %1852 = vmatpush2.bf16.msra.mxu0 0
          %1853 = vmatprep.subr.bf16.mxu0 0
          %1854 = vmatpush2.bf16.msra.mxu0 0
          %1855 = vmatprep.subr.bf16.mxu0 0
          %1856 = vmatpush2.bf16.msra.mxu0 0
          %1857 = vmatprep.subr.bf16.mxu0 0
          %1858 = vmatpush2.bf16.msra.mxu0 0
          %1859 = vmatprep.subr.bf16.mxu0 0
          %1860 = vmatpush2.bf16.msra.mxu0 0
          %1861 = vmatprep.mubr.bf16.mxu0 0
          %1862 = vmatmul.mubr.bf16.gmra.mxu0 %v1827
          %v1863 = vpop.f32.mrf.mxu0
          %v1864 = vadd.f32 %v1813, %v1863
          %v1865 = vpop.f32.mrf.mxu0
          %v1866 = vpop.f32.mrf.mxu0
          %v1867 = vpop.f32.mrf.mxu0
          %1868 = vdwg.mxu0
          %1869 = vst [vmem:[%s1047] sm:$0x1] %v1864
        $region160: #{tpu_custom_call.1} parent=99 // pred_fallthru
          _
        %s1870 = sand.u32 %s563, 1
        %s1871 = scalar_lea.sflag [#allocation5], %s1870
        %s1872 = sand.u32 %s563, 1
        %s1873 = scalar_lea.vmem [#allocation24], %s1872
        // Predicated region
        $region161: #{tpu_custom_call.1} parent=99 // pred_check
          %p1874 = pneg %p573
        $region162: #{tpu_custom_call.1} parent=99 // pred_check_branch
          %1876 = sbr.rel (%p1874) target = $region164
        $region163: #{tpu_custom_call.1} parent=99 // pred_region
          %s1878 = ssub.s32 16, 16
          %1879 = vsyncadd %s1871, %s1878
          %s1880 = smul.addr %s57, 16
          %s1881 = scalar_lea.hbm %s20, %s1880
          %s1883 = sshll.u32 %s1873, 4
          %s1884 = int_to_ptr.vmem [resolvable:$true] %s1883
          %1886 = dma.vmem_to_hbm [thread:$0]  %s1884, 16, %s1881, %s1871
        $region164: #{tpu_custom_call.1} parent=99 // pred_fallthru
          _
      $region100: #{tpu_custom_call.1} parent=5 // pred_fallthru
        _
      %p1887 = scmp.le.s32.totalorder 2, %s48
      // Predicated region
      $region165: #{tpu_custom_call.1} parent=5 // pred_check
        %p1888 = pneg %p1887
      $region166: #{tpu_custom_call.1} parent=5 // pred_check_branch
        %1890 = sbr.rel (%p1888) target = $region168
      $region167: #{tpu_custom_call.1} parent=5 // pred_region
        %s1891 = ssub.s32 %s48, 2
        // Predicated region
        $region169: #{tpu_custom_call.1} parent=167 // pred_check
          %p1892 = pneg %p579
        $region170: #{tpu_custom_call.1} parent=167 // pred_check_branch
          %1894 = sbr.rel (%p1892) target = $region172
        $region171: #{tpu_custom_call.1} parent=167 // pred_region
          %s1895 = sand.u32 %s564, 1
          %s1896 = scalar_lea.sflag [#allocation5], %s1895
          %s1897 = sand.u32 %s564, 1
          %s1898 = scalar_lea.vmem [#allocation24], %s1897
          %1899 = dma.done %s1896, 16
        $region172: #{tpu_custom_call.1} parent=167 // pred_fallthru
          _
      $region168: #{tpu_custom_call.1} parent=5 // pred_fallthru
        _
    $region6: #{tpu_custom_call.1} parent=1 // loop_footer
      %s52 = sadd.s32 1, %s48
    $region7: #{tpu_custom_call.1} parent=1 // loop_footer_branch
      %47 = sbr.rel target = $region3
    $region8: #{tpu_custom_call.1} parent=1 // loop_exit
      _
    %1900 = vsyncpa [#allocation4], 1
    %s1901 = scalar_lea.sflag [#allocation4], 1
    %1902 = vsyncpa %s1901, 1
    %1903 = vsyncpa [#allocation7], 1
    %1904 = vsyncpa [#allocation10], 1
    %s1905 = scalar_lea.sflag [#allocation10], 1
    %1906 = vsyncpa %s1905, 1
    %1907 = vsyncpa [#allocation13], 1
    %s1908 = scalar_lea.sflag [#allocation13], 1
    %1909 = vsyncpa %s1908, 1
    %1910 = vsyncpa [#allocation16], 1
    %s1911 = scalar_lea.sflag [#allocation16], 1
    %1912 = vsyncpa %s1911, 1
    %1913 = vsyncpa [#allocation19], 1
    %s1914 = scalar_lea.sflag [#allocation19], 1
    %1915 = vsyncpa %s1914, 1
    %1916 = vsyncpa [#allocation22], 1
    %s1917 = scalar_lea.sflag [#allocation22], 1
    %1918 = vsyncpa %s1917, 1
    %1919 = vsyncpa [#allocation5], 1
    %s1920 = scalar_lea.sflag [#allocation5], 1
    %1921 = vsyncpa %s1920, 1

</llo_original>
